<compile_context>
chip_gen: v6e
topology: v6e:2x2x1
jax: 0.10.0
libtpu: 0.0.40
codegen_flags: <defaults>
</compile_context>

<pallas_src>
import jax
import jax.numpy as jnp
import numpy as np
from jax import lax
from jax.experimental import pallas as pl
from jax.experimental.pallas import tpu as pltpu


# ------------------------------ fused kernel ---------------------------------
def make_fused_kernel(num_layers, S, Bp):
    def kernel(*refs):
        x_ref = refs[0]
        lstm_refs = refs[1:1 + 3 * num_layers]
        w1_ref, hb1_ref, w2_ref, hb2_ref = refs[1 + 3 * num_layers:-2]
        o_ref = refs[-2]
        y_scratch = refs[-1]                      # VMEM (S*Bp, H) scratch slab

        H = lstm_refs[1].shape[0]
        y = x_ref[...].astype(jnp.float32)        # (S*Bp, D_in)

        for layer in range(num_layers):
            wih = lstm_refs[3 * layer][...]       # (D, 4H)
            whh = lstm_refs[3 * layer + 1][...]   # (H, 4H)
            b = lstm_refs[3 * layer + 2][...]     # (1, 4H)

            # Hoisted input projection: one big matmul per layer.
            xp = jnp.dot(y, wih, preferred_element_type=jnp.float32) + b

            h = jnp.zeros((Bp, H), jnp.float32)
            c = jnp.zeros((Bp, H), jnp.float32)
            for t in range(S):                    # unrolled; static, 8-aligned
                gates = xp[t * Bp:(t + 1) * Bp, :] + jnp.dot(
                    h, whh, preferred_element_type=jnp.float32)   # (Bp, 4H)
                sig = jax.nn.sigmoid(gates)                       # 1 EUP pass
                i_g = sig[:, 0 * H:1 * H]
                f_g = sig[:, 1 * H:2 * H]
                o_g = sig[:, 3 * H:4 * H]
                g_g = jnp.tanh(gates[:, 2 * H:3 * H])             # narrow tanh
                c = f_g * c + i_g * g_g
                h = o_g * jnp.tanh(c)
                # Aligned per-step store; bounds vreg live ranges.
                y_scratch[t * Bp:(t + 1) * Bp, :] = h

            y = y_scratch[...]                    # (S*Bp, H) for next layer

        # Regression head: Linear -> Tanh -> Linear, single lane-dense store.
        hmid = jnp.tanh(
            jnp.dot(y, w1_ref[...], preferred_element_type=jnp.float32)
            + hb1_ref[...])
        o_ref[...] = (
            jnp.dot(hmid, w2_ref[...], preferred_element_type=jnp.float32)
            + hb2_ref[...]).astype(o_ref.dtype)

    return kernel


def reg_lstm_forward(x, params):
    """x: (seq_len, batch, input_size) -> (seq_len, batch, out_dim)."""
    S, B, D_in = x.shape
    num_layers = len(params["lstm"])
    H = params["lstm"][0][1].shape[0]
    out_dim = params["w2_t"].shape[1]

    # Pad batch to the f32 sublane count so every per-step tile is aligned.
    Bp = max(8, ((B + 7) // 8) * 8)
    x_pad = jnp.zeros((S, Bp, D_in), jnp.float32).at[:, :B, :].set(x)

    flat_inputs = [x_pad.reshape(S * Bp, D_in)]
    for (w_ih_t, w_hh_t, bias) in params["lstm"]:
        flat_inputs += [w_ih_t, w_hh_t, bias]
    flat_inputs += [params["w1_t"], params["b1"], params["w2_t"], params["b2"]]

    vmem_spec = pl.BlockSpec(memory_space=pltpu.MemorySpace.VMEM)
    out = pl.pallas_call(
        make_fused_kernel(num_layers, S, Bp),
        out_shape=jax.ShapeDtypeStruct((S * Bp, out_dim), jnp.float32),
        in_specs=[vmem_spec] * len(flat_inputs),
        out_specs=vmem_spec,
        scratch_shapes=[pltpu.VMEM((S * Bp, H), jnp.float32)],
    )(*flat_inputs)

    return out.reshape(S, Bp, out_dim)[:, :B, :]


# -------------------------- Pure-JAX reference check --------------------------
def reg_lstm_reference(x, params):
    y = x
    for (w_ih_t, w_hh_t, bias) in params["lstm"]:
        S, B, _ = y.shape
        H = w_hh_t.shape[0]

        def step(carry, xt):
            h, c = carry
            gates = xt @ w_ih_t + h @ w_hh_t + bias[0]
            i = jax.nn.sigmoid(gates[:, 0 * H:1 * H])
            f = jax.nn.sigmoid(gates[:, 1 * H:2 * H])
            g = jnp.tanh(gates[:, 2 * H:3 * H])
            o = jax.nn.sigmoid(gates[:, 3 * H:4 * H])
            c = f * c + i * g
            h = o * jnp.tanh(c)
            return (h, c), h

        init = (jnp.zeros((B, H), jnp.float32), jnp.zeros((B, H), jnp.float32))
        _, y = lax.scan(step, init, y)
    S, B, H = y.shape
    z = y.reshape(S * B, H)
    z = jnp.tanh(z @ params["w1_t"] + params["b1"][0])
    z = z @ params["w2_t"] + params["b2"][0]
    return z.reshape(S, B, -1)


# -------------------------------- Init / main ---------------------------------
def init_params(key, input_size, out_dim, mid_dim, mid_layers):
    """Deterministic init mirroring PyTorch shapes (weights stored transposed)."""
    k = 1.0 / np.sqrt(mid_dim)
    params = {"lstm": []}
    for layer in range(mid_layers):
        d_in = input_size if layer == 0 else mid_dim
        key, k1, k2, k3, k4 = jax.random.split(key, 5)
        w_ih_t = jax.random.uniform(k1, (d_in, 4 * mid_dim), jnp.float32, -k, k)
        w_hh_t = jax.random.uniform(k2, (mid_dim, 4 * mid_dim), jnp.float32, -k, k)
        b_ih = jax.random.uniform(k3, (4 * mid_dim,), jnp.float32, -k, k)
        b_hh = jax.random.uniform(k4, (4 * mid_dim,), jnp.float32, -k, k)
        params["lstm"].append((w_ih_t, w_hh_t, (b_ih + b_hh)[None, :]))
    key, k1, k2, k3, k4 = jax.random.split(key, 5)
    params["w1_t"] = jax.random.uniform(k1, (mid_dim, mid_dim), jnp.float32, -k, k)
    params["b1"] = jax.random.uniform(k2, (1, mid_dim), jnp.float32, -k, k)
    params["w2_t"] = jax.random.uniform(k3, (mid_dim, out_dim), jnp.float32, -k, k)
    params["b2"] = jax.random.uniform(k4, (1, out_dim), jnp.float32, -k, k)
    return params


if __name__ == "__main__":
    input_size, out_dim, mid_dim, mid_layers = 8, 4, 32, 2
    seq_len, batch = 8, 2

    key = jax.random.PRNGKey(0)
    key, xkey = jax.random.split(key)
    x = jax.random.normal(xkey, (seq_len, batch, input_size), jnp.float32)
    params = init_params(key, input_size, out_dim, mid_dim, mid_layers)

    out = jax.block_until_ready(reg_lstm_forward(x, params))
    ref = jax.block_until_ready(reg_lstm_reference(x, params))

    assert out.shape == (seq_len, batch, out_dim)
    np.testing.assert_allclose(np.asarray(out), np.asarray(ref),
                               rtol=1e-4, atol=1e-4)
    print("KERNEL_OK")
</pallas_src>

<mosaic_0001>
module attributes {stable_mosaic.version = 11 : i64} {
  func.func @kernel(%arg0: memref<64x8xf32, #tpu.memory_space<vmem>>, %arg1: memref<8x128xf32, #tpu.memory_space<vmem>>, %arg2: memref<32x128xf32, #tpu.memory_space<vmem>>, %arg3: memref<1x128xf32, #tpu.memory_space<vmem>>, %arg4: memref<32x128xf32, #tpu.memory_space<vmem>>, %arg5: memref<32x128xf32, #tpu.memory_space<vmem>>, %arg6: memref<1x128xf32, #tpu.memory_space<vmem>>, %arg7: memref<32x32xf32, #tpu.memory_space<vmem>>, %arg8: memref<1x32xf32, #tpu.memory_space<vmem>>, %arg9: memref<32x4xf32, #tpu.memory_space<vmem>>, %arg10: memref<1x4xf32, #tpu.memory_space<vmem>>, %arg11: memref<64x4xf32, #tpu.memory_space<vmem>>, %arg12: memref<64x32xf32, #tpu.memory_space<vmem>>) attributes {dimension_semantics = [], scalar_prefetch = 0 : i64, scratch_operands = 1 : i64, tpu.core_type = #tpu.core_type<tc>} {
    %c0 = arith.constant 0 : index
    %c0_0 = arith.constant 0 : index
    %0 = vector.load %arg0[%c0, %c0_0] : memref<64x8xf32, #tpu.memory_space<vmem>>, vector<64x8xf32>
    %c0_1 = arith.constant 0 : index
    %c0_2 = arith.constant 0 : index
    %1 = vector.load %arg1[%c0_1, %c0_2] : memref<8x128xf32, #tpu.memory_space<vmem>>, vector<8x128xf32>
    %c0_3 = arith.constant 0 : index
    %c0_4 = arith.constant 0 : index
    %2 = vector.load %arg2[%c0_3, %c0_4] : memref<32x128xf32, #tpu.memory_space<vmem>>, vector<32x128xf32>
    %c0_5 = arith.constant 0 : index
    %c0_6 = arith.constant 0 : index
    %3 = vector.load %arg3[%c0_5, %c0_6] : memref<1x128xf32, #tpu.memory_space<vmem>>, vector<1x128xf32>
    %cst = arith.constant dense<0.000000e+00> : vector<64x128xf32>
    %4 = tpu.matmul %0, %1, %cst {dimension_numbers = #tpu.dot_dimension_numbers<[1], [0], [0], [1], [0, 0, 1, 1], [], []>} : vector<64x8xf32>, vector<8x128xf32>, vector<64x128xf32> -> vector<64x128xf32>
    %5 = vector.broadcast %3 : vector<1x128xf32> to vector<64x128xf32>
    %6 = arith.addf %4, %5 : vector<64x128xf32>
    %cst_7 = arith.constant 0.000000e+00 : f32
    %7 = vector.broadcast %cst_7 : f32 to vector<8x32xf32>
    %cst_8 = arith.constant 0.000000e+00 : f32
    %8 = vector.broadcast %cst_8 : f32 to vector<8x32xf32>
    %9 = vector.extract_strided_slice %6 {offsets = [0, 0], sizes = [8, 128], strides = [1, 1]} : vector<64x128xf32> to vector<8x128xf32>
    %cst_9 = arith.constant dense<0.000000e+00> : vector<8x128xf32>
    %10 = tpu.matmul %7, %2, %cst_9 {dimension_numbers = #tpu.dot_dimension_numbers<[1], [0], [0], [1], [0, 0, 1, 1], [], []>} : vector<8x32xf32>, vector<32x128xf32>, vector<8x128xf32> -> vector<8x128xf32>
    %11 = arith.addf %9, %10 : vector<8x128xf32>
    %12 = arith.negf %11 : vector<8x128xf32>
    %13 = math.exp %12 : vector<8x128xf32>
    %cst_10 = arith.constant 1.000000e+00 : f32
    %14 = vector.broadcast %cst_10 : f32 to vector<8x128xf32>
    %15 = arith.addf %14, %13 : vector<8x128xf32>
    %16 = arith.divf %14, %15 : vector<8x128xf32>
    %17 = vector.extract_strided_slice %16 {offsets = [0, 0], sizes = [8, 32], strides = [1, 1]} : vector<8x128xf32> to vector<8x32xf32>
    %18 = vector.extract_strided_slice %16 {offsets = [0, 32], sizes = [8, 32], strides = [1, 1]} : vector<8x128xf32> to vector<8x32xf32>
    %19 = vector.extract_strided_slice %16 {offsets = [0, 96], sizes = [8, 32], strides = [1, 1]} : vector<8x128xf32> to vector<8x32xf32>
    %20 = vector.extract_strided_slice %11 {offsets = [0, 64], sizes = [8, 32], strides = [1, 1]} : vector<8x128xf32> to vector<8x32xf32>
    %21 = math.tanh %20 : vector<8x32xf32>
    %22 = arith.mulf %18, %8 : vector<8x32xf32>
    %23 = arith.mulf %17, %21 : vector<8x32xf32>
    %24 = arith.addf %22, %23 : vector<8x32xf32>
    %25 = math.tanh %24 : vector<8x32xf32>
    %26 = arith.mulf %19, %25 : vector<8x32xf32>
    %c0_11 = arith.constant 0 : index
    %c0_12 = arith.constant 0 : index
    %27 = vector.load %arg12[%c0_11, %c0_12] : memref<64x32xf32, #tpu.memory_space<vmem>>, vector<8x32xf32>
    tpu.vector_store %arg12[%c0_11, %c0_12], %26 {strides = array<i32>} : memref<64x32xf32, #tpu.memory_space<vmem>>, vector<8x32xf32>,
    %28 = vector.extract_strided_slice %6 {offsets = [8, 0], sizes = [8, 128], strides = [1, 1]} : vector<64x128xf32> to vector<8x128xf32>
    %cst_13 = arith.constant dense<0.000000e+00> : vector<8x128xf32>
    %29 = tpu.matmul %26, %2, %cst_13 {dimension_numbers = #tpu.dot_dimension_numbers<[1], [0], [0], [1], [0, 0, 1, 1], [], []>} : vector<8x32xf32>, vector<32x128xf32>, vector<8x128xf32> -> vector<8x128xf32>
    %30 = arith.addf %28, %29 : vector<8x128xf32>
    %31 = arith.negf %30 : vector<8x128xf32>
    %32 = math.exp %31 : vector<8x128xf32>
    %cst_14 = arith.constant 1.000000e+00 : f32
    %33 = vector.broadcast %cst_14 : f32 to vector<8x128xf32>
    %34 = arith.addf %33, %32 : vector<8x128xf32>
    %35 = arith.divf %33, %34 : vector<8x128xf32>
    %36 = vector.extract_strided_slice %35 {offsets = [0, 0], sizes = [8, 32], strides = [1, 1]} : vector<8x128xf32> to vector<8x32xf32>
    %37 = vector.extract_strided_slice %35 {offsets = [0, 32], sizes = [8, 32], strides = [1, 1]} : vector<8x128xf32> to vector<8x32xf32>
    %38 = vector.extract_strided_slice %35 {offsets = [0, 96], sizes = [8, 32], strides = [1, 1]} : vector<8x128xf32> to vector<8x32xf32>
    %39 = vector.extract_strided_slice %30 {offsets = [0, 64], sizes = [8, 32], strides = [1, 1]} : vector<8x128xf32> to vector<8x32xf32>
    %40 = math.tanh %39 : vector<8x32xf32>
    %41 = arith.mulf %37, %24 : vector<8x32xf32>
    %42 = arith.mulf %36, %40 : vector<8x32xf32>
    %43 = arith.addf %41, %42 : vector<8x32xf32>
    %44 = math.tanh %43 : vector<8x32xf32>
    %45 = arith.mulf %38, %44 : vector<8x32xf32>
    %c8 = arith.constant 8 : index
    %c0_15 = arith.constant 0 : index
    %46 = vector.load %arg12[%c8, %c0_15] : memref<64x32xf32, #tpu.memory_space<vmem>>, vector<8x32xf32>
    tpu.vector_store %arg12[%c8, %c0_15], %45 {strides = array<i32>} : memref<64x32xf32, #tpu.memory_space<vmem>>, vector<8x32xf32>,
    %47 = vector.extract_strided_slice %6 {offsets = [16, 0], sizes = [8, 128], strides = [1, 1]} : vector<64x128xf32> to vector<8x128xf32>
    %cst_16 = arith.constant dense<0.000000e+00> : vector<8x128xf32>
    %48 = tpu.matmul %45, %2, %cst_16 {dimension_numbers = #tpu.dot_dimension_numbers<[1], [0], [0], [1], [0, 0, 1, 1], [], []>} : vector<8x32xf32>, vector<32x128xf32>, vector<8x128xf32> -> vector<8x128xf32>
    %49 = arith.addf %47, %48 : vector<8x128xf32>
    %50 = arith.negf %49 : vector<8x128xf32>
    %51 = math.exp %50 : vector<8x128xf32>
    %cst_17 = arith.constant 1.000000e+00 : f32
    %52 = vector.broadcast %cst_17 : f32 to vector<8x128xf32>
    %53 = arith.addf %52, %51 : vector<8x128xf32>
    %54 = arith.divf %52, %53 : vector<8x128xf32>
    %55 = vector.extract_strided_slice %54 {offsets = [0, 0], sizes = [8, 32], strides = [1, 1]} : vector<8x128xf32> to vector<8x32xf32>
    %56 = vector.extract_strided_slice %54 {offsets = [0, 32], sizes = [8, 32], strides = [1, 1]} : vector<8x128xf32> to vector<8x32xf32>
    %57 = vector.extract_strided_slice %54 {offsets = [0, 96], sizes = [8, 32], strides = [1, 1]} : vector<8x128xf32> to vector<8x32xf32>
    %58 = vector.extract_strided_slice %49 {offsets = [0, 64], sizes = [8, 32], strides = [1, 1]} : vector<8x128xf32> to vector<8x32xf32>
    %59 = math.tanh %58 : vector<8x32xf32>
    %60 = arith.mulf %56, %43 : vector<8x32xf32>
    %61 = arith.mulf %55, %59 : vector<8x32xf32>
    %62 = arith.addf %60, %61 : vector<8x32xf32>
    %63 = math.tanh %62 : vector<8x32xf32>
    %64 = arith.mulf %57, %63 : vector<8x32xf32>
    %c16 = arith.constant 16 : index
    %c0_18 = arith.constant 0 : index
    %65 = vector.load %arg12[%c16, %c0_18] : memref<64x32xf32, #tpu.memory_space<vmem>>, vector<8x32xf32>
    tpu.vector_store %arg12[%c16, %c0_18], %64 {strides = array<i32>} : memref<64x32xf32, #tpu.memory_space<vmem>>, vector<8x32xf32>,
    %66 = vector.extract_strided_slice %6 {offsets = [24, 0], sizes = [8, 128], strides = [1, 1]} : vector<64x128xf32> to vector<8x128xf32>
    %cst_19 = arith.constant dense<0.000000e+00> : vector<8x128xf32>
    %67 = tpu.matmul %64, %2, %cst_19 {dimension_numbers = #tpu.dot_dimension_numbers<[1], [0], [0], [1], [0, 0, 1, 1], [], []>} : vector<8x32xf32>, vector<32x128xf32>, vector<8x128xf32> -> vector<8x128xf32>
    %68 = arith.addf %66, %67 : vector<8x128xf32>
    %69 = arith.negf %68 : vector<8x128xf32>
    %70 = math.exp %69 : vector<8x128xf32>
    %cst_20 = arith.constant 1.000000e+00 : f32
    %71 = vector.broadcast %cst_20 : f32 to vector<8x128xf32>
    %72 = arith.addf %71, %70 : vector<8x128xf32>
    %73 = arith.divf %71, %72 : vector<8x128xf32>
    %74 = vector.extract_strided_slice %73 {offsets = [0, 0], sizes = [8, 32], strides = [1, 1]} : vector<8x128xf32> to vector<8x32xf32>
    %75 = vector.extract_strided_slice %73 {offsets = [0, 32], sizes = [8, 32], strides = [1, 1]} : vector<8x128xf32> to vector<8x32xf32>
    %76 = vector.extract_strided_slice %73 {offsets = [0, 96], sizes = [8, 32], strides = [1, 1]} : vector<8x128xf32> to vector<8x32xf32>
    %77 = vector.extract_strided_slice %68 {offsets = [0, 64], sizes = [8, 32], strides = [1, 1]} : vector<8x128xf32> to vector<8x32xf32>
    %78 = math.tanh %77 : vector<8x32xf32>
    %79 = arith.mulf %75, %62 : vector<8x32xf32>
    %80 = arith.mulf %74, %78 : vector<8x32xf32>
    %81 = arith.addf %79, %80 : vector<8x32xf32>
    %82 = math.tanh %81 : vector<8x32xf32>
    %83 = arith.mulf %76, %82 : vector<8x32xf32>
    %c24 = arith.constant 24 : index
    %c0_21 = arith.constant 0 : index
    %84 = vector.load %arg12[%c24, %c0_21] : memref<64x32xf32, #tpu.memory_space<vmem>>, vector<8x32xf32>
    tpu.vector_store %arg12[%c24, %c0_21], %83 {strides = array<i32>} : memref<64x32xf32, #tpu.memory_space<vmem>>, vector<8x32xf32>,
    %85 = vector.extract_strided_slice %6 {offsets = [32, 0], sizes = [8, 128], strides = [1, 1]} : vector<64x128xf32> to vector<8x128xf32>
    %cst_22 = arith.constant dense<0.000000e+00> : vector<8x128xf32>
    %86 = tpu.matmul %83, %2, %cst_22 {dimension_numbers = #tpu.dot_dimension_numbers<[1], [0], [0], [1], [0, 0, 1, 1], [], []>} : vector<8x32xf32>, vector<32x128xf32>, vector<8x128xf32> -> vector<8x128xf32>
    %87 = arith.addf %85, %86 : vector<8x128xf32>
    %88 = arith.negf %87 : vector<8x128xf32>
    %89 = math.exp %88 : vector<8x128xf32>
    %cst_23 = arith.constant 1.000000e+00 : f32
    %90 = vector.broadcast %cst_23 : f32 to vector<8x128xf32>
    %91 = arith.addf %90, %89 : vector<8x128xf32>
    %92 = arith.divf %90, %91 : vector<8x128xf32>
    %93 = vector.extract_strided_slice %92 {offsets = [0, 0], sizes = [8, 32], strides = [1, 1]} : vector<8x128xf32> to vector<8x32xf32>
    %94 = vector.extract_strided_slice %92 {offsets = [0, 32], sizes = [8, 32], strides = [1, 1]} : vector<8x128xf32> to vector<8x32xf32>
    %95 = vector.extract_strided_slice %92 {offsets = [0, 96], sizes = [8, 32], strides = [1, 1]} : vector<8x128xf32> to vector<8x32xf32>
    %96 = vector.extract_strided_slice %87 {offsets = [0, 64], sizes = [8, 32], strides = [1, 1]} : vector<8x128xf32> to vector<8x32xf32>
    %97 = math.tanh %96 : vector<8x32xf32>
    %98 = arith.mulf %94, %81 : vector<8x32xf32>
    %99 = arith.mulf %93, %97 : vector<8x32xf32>
    %100 = arith.addf %98, %99 : vector<8x32xf32>
    %101 = math.tanh %100 : vector<8x32xf32>
    %102 = arith.mulf %95, %101 : vector<8x32xf32>
    %c32 = arith.constant 32 : index
    %c0_24 = arith.constant 0 : index
    %103 = vector.load %arg12[%c32, %c0_24] : memref<64x32xf32, #tpu.memory_space<vmem>>, vector<8x32xf32>
    tpu.vector_store %arg12[%c32, %c0_24], %102 {strides = array<i32>} : memref<64x32xf32, #tpu.memory_space<vmem>>, vector<8x32xf32>,
    %104 = vector.extract_strided_slice %6 {offsets = [40, 0], sizes = [8, 128], strides = [1, 1]} : vector<64x128xf32> to vector<8x128xf32>
    %cst_25 = arith.constant dense<0.000000e+00> : vector<8x128xf32>
    %105 = tpu.matmul %102, %2, %cst_25 {dimension_numbers = #tpu.dot_dimension_numbers<[1], [0], [0], [1], [0, 0, 1, 1], [], []>} : vector<8x32xf32>, vector<32x128xf32>, vector<8x128xf32> -> vector<8x128xf32>
    %106 = arith.addf %104, %105 : vector<8x128xf32>
    %107 = arith.negf %106 : vector<8x128xf32>
    %108 = math.exp %107 : vector<8x128xf32>
    %cst_26 = arith.constant 1.000000e+00 : f32
    %109 = vector.broadcast %cst_26 : f32 to vector<8x128xf32>
    %110 = arith.addf %109, %108 : vector<8x128xf32>
    %111 = arith.divf %109, %110 : vector<8x128xf32>
    %112 = vector.extract_strided_slice %111 {offsets = [0, 0], sizes = [8, 32], strides = [1, 1]} : vector<8x128xf32> to vector<8x32xf32>
    %113 = vector.extract_strided_slice %111 {offsets = [0, 32], sizes = [8, 32], strides = [1, 1]} : vector<8x128xf32> to vector<8x32xf32>
    %114 = vector.extract_strided_slice %111 {offsets = [0, 96], sizes = [8, 32], strides = [1, 1]} : vector<8x128xf32> to vector<8x32xf32>
    %115 = vector.extract_strided_slice %106 {offsets = [0, 64], sizes = [8, 32], strides = [1, 1]} : vector<8x128xf32> to vector<8x32xf32>
    %116 = math.tanh %115 : vector<8x32xf32>
    %117 = arith.mulf %113, %100 : vector<8x32xf32>
    %118 = arith.mulf %112, %116 : vector<8x32xf32>
    %119 = arith.addf %117, %118 : vector<8x32xf32>
    %120 = math.tanh %119 : vector<8x32xf32>
    %121 = arith.mulf %114, %120 : vector<8x32xf32>
    %c40 = arith.constant 40 : index
    %c0_27 = arith.constant 0 : index
    %122 = vector.load %arg12[%c40, %c0_27] : memref<64x32xf32, #tpu.memory_space<vmem>>, vector<8x32xf32>
    tpu.vector_store %arg12[%c40, %c0_27], %121 {strides = array<i32>} : memref<64x32xf32, #tpu.memory_space<vmem>>, vector<8x32xf32>,
    %123 = vector.extract_strided_slice %6 {offsets = [48, 0], sizes = [8, 128], strides = [1, 1]} : vector<64x128xf32> to vector<8x128xf32>
    %cst_28 = arith.constant dense<0.000000e+00> : vector<8x128xf32>
    %124 = tpu.matmul %121, %2, %cst_28 {dimension_numbers = #tpu.dot_dimension_numbers<[1], [0], [0], [1], [0, 0, 1, 1], [], []>} : vector<8x32xf32>, vector<32x128xf32>, vector<8x128xf32> -> vector<8x128xf32>
    %125 = arith.addf %123, %124 : vector<8x128xf32>
    %126 = arith.negf %125 : vector<8x128xf32>
    %127 = math.exp %126 : vector<8x128xf32>
    %cst_29 = arith.constant 1.000000e+00 : f32
    %128 = vector.broadcast %cst_29 : f32 to vector<8x128xf32>
    %129 = arith.addf %128, %127 : vector<8x128xf32>
    %130 = arith.divf %128, %129 : vector<8x128xf32>
    %131 = vector.extract_strided_slice %130 {offsets = [0, 0], sizes = [8, 32], strides = [1, 1]} : vector<8x128xf32> to vector<8x32xf32>
    %132 = vector.extract_strided_slice %130 {offsets = [0, 32], sizes = [8, 32], strides = [1, 1]} : vector<8x128xf32> to vector<8x32xf32>
    %133 = vector.extract_strided_slice %130 {offsets = [0, 96], sizes = [8, 32], strides = [1, 1]} : vector<8x128xf32> to vector<8x32xf32>
    %134 = vector.extract_strided_slice %125 {offsets = [0, 64], sizes = [8, 32], strides = [1, 1]} : vector<8x128xf32> to vector<8x32xf32>
    %135 = math.tanh %134 : vector<8x32xf32>
    %136 = arith.mulf %132, %119 : vector<8x32xf32>
    %137 = arith.mulf %131, %135 : vector<8x32xf32>
    %138 = arith.addf %136, %137 : vector<8x32xf32>
    %139 = math.tanh %138 : vector<8x32xf32>
    %140 = arith.mulf %133, %139 : vector<8x32xf32>
    %c48 = arith.constant 48 : index
    %c0_30 = arith.constant 0 : index
    %141 = vector.load %arg12[%c48, %c0_30] : memref<64x32xf32, #tpu.memory_space<vmem>>, vector<8x32xf32>
    tpu.vector_store %arg12[%c48, %c0_30], %140 {strides = array<i32>} : memref<64x32xf32, #tpu.memory_space<vmem>>, vector<8x32xf32>,
    %142 = vector.extract_strided_slice %6 {offsets = [56, 0], sizes = [8, 128], strides = [1, 1]} : vector<64x128xf32> to vector<8x128xf32>
    %cst_31 = arith.constant dense<0.000000e+00> : vector<8x128xf32>
    %143 = tpu.matmul %140, %2, %cst_31 {dimension_numbers = #tpu.dot_dimension_numbers<[1], [0], [0], [1], [0, 0, 1, 1], [], []>} : vector<8x32xf32>, vector<32x128xf32>, vector<8x128xf32> -> vector<8x128xf32>
    %144 = arith.addf %142, %143 : vector<8x128xf32>
    %145 = arith.negf %144 : vector<8x128xf32>
    %146 = math.exp %145 : vector<8x128xf32>
    %cst_32 = arith.constant 1.000000e+00 : f32
    %147 = vector.broadcast %cst_32 : f32 to vector<8x128xf32>
    %148 = arith.addf %147, %146 : vector<8x128xf32>
    %149 = arith.divf %147, %148 : vector<8x128xf32>
    %150 = vector.extract_strided_slice %149 {offsets = [0, 0], sizes = [8, 32], strides = [1, 1]} : vector<8x128xf32> to vector<8x32xf32>
    %151 = vector.extract_strided_slice %149 {offsets = [0, 32], sizes = [8, 32], strides = [1, 1]} : vector<8x128xf32> to vector<8x32xf32>
    %152 = vector.extract_strided_slice %149 {offsets = [0, 96], sizes = [8, 32], strides = [1, 1]} : vector<8x128xf32> to vector<8x32xf32>
    %153 = vector.extract_strided_slice %144 {offsets = [0, 64], sizes = [8, 32], strides = [1, 1]} : vector<8x128xf32> to vector<8x32xf32>
    %154 = math.tanh %153 : vector<8x32xf32>
    %155 = arith.mulf %151, %138 : vector<8x32xf32>
    %156 = arith.mulf %150, %154 : vector<8x32xf32>
    %157 = arith.addf %155, %156 : vector<8x32xf32>
    %158 = math.tanh %157 : vector<8x32xf32>
    %159 = arith.mulf %152, %158 : vector<8x32xf32>
    %c56 = arith.constant 56 : index
    %c0_33 = arith.constant 0 : index
    %160 = vector.load %arg12[%c56, %c0_33] : memref<64x32xf32, #tpu.memory_space<vmem>>, vector<8x32xf32>
    tpu.vector_store %arg12[%c56, %c0_33], %159 {strides = array<i32>} : memref<64x32xf32, #tpu.memory_space<vmem>>, vector<8x32xf32>,
    %c0_34 = arith.constant 0 : index
    %c0_35 = arith.constant 0 : index
    %161 = vector.load %arg12[%c0_34, %c0_35] : memref<64x32xf32, #tpu.memory_space<vmem>>, vector<64x32xf32>
    %c0_36 = arith.constant 0 : index
    %c0_37 = arith.constant 0 : index
    %162 = vector.load %arg4[%c0_36, %c0_37] : memref<32x128xf32, #tpu.memory_space<vmem>>, vector<32x128xf32>
    %c0_38 = arith.constant 0 : index
    %c0_39 = arith.constant 0 : index
    %163 = vector.load %arg5[%c0_38, %c0_39] : memref<32x128xf32, #tpu.memory_space<vmem>>, vector<32x128xf32>
    %c0_40 = arith.constant 0 : index
    %c0_41 = arith.constant 0 : index
    %164 = vector.load %arg6[%c0_40, %c0_41] : memref<1x128xf32, #tpu.memory_space<vmem>>, vector<1x128xf32>
    %cst_42 = arith.constant dense<0.000000e+00> : vector<64x128xf32>
    %165 = tpu.matmul %161, %162, %cst_42 {dimension_numbers = #tpu.dot_dimension_numbers<[1], [0], [0], [1], [0, 0, 1, 1], [], []>} : vector<64x32xf32>, vector<32x128xf32>, vector<64x128xf32> -> vector<64x128xf32>
    %166 = vector.broadcast %164 : vector<1x128xf32> to vector<64x128xf32>
    %167 = arith.addf %165, %166 : vector<64x128xf32>
    %cst_43 = arith.constant 0.000000e+00 : f32
    %168 = vector.broadcast %cst_43 : f32 to vector<8x32xf32>
    %cst_44 = arith.constant 0.000000e+00 : f32
    %169 = vector.broadcast %cst_44 : f32 to vector<8x32xf32>
    %170 = vector.extract_strided_slice %167 {offsets = [0, 0], sizes = [8, 128], strides = [1, 1]} : vector<64x128xf32> to vector<8x128xf32>
    %cst_45 = arith.constant dense<0.000000e+00> : vector<8x128xf32>
    %171 = tpu.matmul %168, %163, %cst_45 {dimension_numbers = #tpu.dot_dimension_numbers<[1], [0], [0], [1], [0, 0, 1, 1], [], []>} : vector<8x32xf32>, vector<32x128xf32>, vector<8x128xf32> -> vector<8x128xf32>
    %172 = arith.addf %170, %171 : vector<8x128xf32>
    %173 = arith.negf %172 : vector<8x128xf32>
    %174 = math.exp %173 : vector<8x128xf32>
    %cst_46 = arith.constant 1.000000e+00 : f32
    %175 = vector.broadcast %cst_46 : f32 to vector<8x128xf32>
    %176 = arith.addf %175, %174 : vector<8x128xf32>
    %177 = arith.divf %175, %176 : vector<8x128xf32>
    %178 = vector.extract_strided_slice %177 {offsets = [0, 0], sizes = [8, 32], strides = [1, 1]} : vector<8x128xf32> to vector<8x32xf32>
    %179 = vector.extract_strided_slice %177 {offsets = [0, 32], sizes = [8, 32], strides = [1, 1]} : vector<8x128xf32> to vector<8x32xf32>
    %180 = vector.extract_strided_slice %177 {offsets = [0, 96], sizes = [8, 32], strides = [1, 1]} : vector<8x128xf32> to vector<8x32xf32>
    %181 = vector.extract_strided_slice %172 {offsets = [0, 64], sizes = [8, 32], strides = [1, 1]} : vector<8x128xf32> to vector<8x32xf32>
    %182 = math.tanh %181 : vector<8x32xf32>
    %183 = arith.mulf %179, %169 : vector<8x32xf32>
    %184 = arith.mulf %178, %182 : vector<8x32xf32>
    %185 = arith.addf %183, %184 : vector<8x32xf32>
    %186 = math.tanh %185 : vector<8x32xf32>
    %187 = arith.mulf %180, %186 : vector<8x32xf32>
    %c0_47 = arith.constant 0 : index
    %c0_48 = arith.constant 0 : index
    %188 = vector.load %arg12[%c0_47, %c0_48] : memref<64x32xf32, #tpu.memory_space<vmem>>, vector<8x32xf32>
    tpu.vector_store %arg12[%c0_47, %c0_48], %187 {strides = array<i32>} : memref<64x32xf32, #tpu.memory_space<vmem>>, vector<8x32xf32>,
    %189 = vector.extract_strided_slice %167 {offsets = [8, 0], sizes = [8, 128], strides = [1, 1]} : vector<64x128xf32> to vector<8x128xf32>
    %cst_49 = arith.constant dense<0.000000e+00> : vector<8x128xf32>
    %190 = tpu.matmul %187, %163, %cst_49 {dimension_numbers = #tpu.dot_dimension_numbers<[1], [0], [0], [1], [0, 0, 1, 1], [], []>} : vector<8x32xf32>, vector<32x128xf32>, vector<8x128xf32> -> vector<8x128xf32>
    %191 = arith.addf %189, %190 : vector<8x128xf32>
    %192 = arith.negf %191 : vector<8x128xf32>
    %193 = math.exp %192 : vector<8x128xf32>
    %cst_50 = arith.constant 1.000000e+00 : f32
    %194 = vector.broadcast %cst_50 : f32 to vector<8x128xf32>
    %195 = arith.addf %194, %193 : vector<8x128xf32>
    %196 = arith.divf %194, %195 : vector<8x128xf32>
    %197 = vector.extract_strided_slice %196 {offsets = [0, 0], sizes = [8, 32], strides = [1, 1]} : vector<8x128xf32> to vector<8x32xf32>
    %198 = vector.extract_strided_slice %196 {offsets = [0, 32], sizes = [8, 32], strides = [1, 1]} : vector<8x128xf32> to vector<8x32xf32>
    %199 = vector.extract_strided_slice %196 {offsets = [0, 96], sizes = [8, 32], strides = [1, 1]} : vector<8x128xf32> to vector<8x32xf32>
    %200 = vector.extract_strided_slice %191 {offsets = [0, 64], sizes = [8, 32], strides = [1, 1]} : vector<8x128xf32> to vector<8x32xf32>
    %201 = math.tanh %200 : vector<8x32xf32>
    %202 = arith.mulf %198, %185 : vector<8x32xf32>
    %203 = arith.mulf %197, %201 : vector<8x32xf32>
    %204 = arith.addf %202, %203 : vector<8x32xf32>
    %205 = math.tanh %204 : vector<8x32xf32>
    %206 = arith.mulf %199, %205 : vector<8x32xf32>
    %c8_51 = arith.constant 8 : index
    %c0_52 = arith.constant 0 : index
    %207 = vector.load %arg12[%c8_51, %c0_52] : memref<64x32xf32, #tpu.memory_space<vmem>>, vector<8x32xf32>
    tpu.vector_store %arg12[%c8_51, %c0_52], %206 {strides = array<i32>} : memref<64x32xf32, #tpu.memory_space<vmem>>, vector<8x32xf32>,
    %208 = vector.extract_strided_slice %167 {offsets = [16, 0], sizes = [8, 128], strides = [1, 1]} : vector<64x128xf32> to vector<8x128xf32>
    %cst_53 = arith.constant dense<0.000000e+00> : vector<8x128xf32>
    %209 = tpu.matmul %206, %163, %cst_53 {dimension_numbers = #tpu.dot_dimension_numbers<[1], [0], [0], [1], [0, 0, 1, 1], [], []>} : vector<8x32xf32>, vector<32x128xf32>, vector<8x128xf32> -> vector<8x128xf32>
    %210 = arith.addf %208, %209 : vector<8x128xf32>
    %211 = arith.negf %210 : vector<8x128xf32>
    %212 = math.exp %211 : vector<8x128xf32>
    %cst_54 = arith.constant 1.000000e+00 : f32
    %213 = vector.broadcast %cst_54 : f32 to vector<8x128xf32>
    %214 = arith.addf %213, %212 : vector<8x128xf32>
    %215 = arith.divf %213, %214 : vector<8x128xf32>
    %216 = vector.extract_strided_slice %215 {offsets = [0, 0], sizes = [8, 32], strides = [1, 1]} : vector<8x128xf32> to vector<8x32xf32>
    %217 = vector.extract_strided_slice %215 {offsets = [0, 32], sizes = [8, 32], strides = [1, 1]} : vector<8x128xf32> to vector<8x32xf32>
    %218 = vector.extract_strided_slice %215 {offsets = [0, 96], sizes = [8, 32], strides = [1, 1]} : vector<8x128xf32> to vector<8x32xf32>
    %219 = vector.extract_strided_slice %210 {offsets = [0, 64], sizes = [8, 32], strides = [1, 1]} : vector<8x128xf32> to vector<8x32xf32>
    %220 = math.tanh %219 : vector<8x32xf32>
    %221 = arith.mulf %217, %204 : vector<8x32xf32>
    %222 = arith.mulf %216, %220 : vector<8x32xf32>
    %223 = arith.addf %221, %222 : vector<8x32xf32>
    %224 = math.tanh %223 : vector<8x32xf32>
    %225 = arith.mulf %218, %224 : vector<8x32xf32>
    %c16_55 = arith.constant 16 : index
    %c0_56 = arith.constant 0 : index
    %226 = vector.load %arg12[%c16_55, %c0_56] : memref<64x32xf32, #tpu.memory_space<vmem>>, vector<8x32xf32>
    tpu.vector_store %arg12[%c16_55, %c0_56], %225 {strides = array<i32>} : memref<64x32xf32, #tpu.memory_space<vmem>>, vector<8x32xf32>,
    %227 = vector.extract_strided_slice %167 {offsets = [24, 0], sizes = [8, 128], strides = [1, 1]} : vector<64x128xf32> to vector<8x128xf32>
    %cst_57 = arith.constant dense<0.000000e+00> : vector<8x128xf32>
    %228 = tpu.matmul %225, %163, %cst_57 {dimension_numbers = #tpu.dot_dimension_numbers<[1], [0], [0], [1], [0, 0, 1, 1], [], []>} : vector<8x32xf32>, vector<32x128xf32>, vector<8x128xf32> -> vector<8x128xf32>
    %229 = arith.addf %227, %228 : vector<8x128xf32>
    %230 = arith.negf %229 : vector<8x128xf32>
    %231 = math.exp %230 : vector<8x128xf32>
    %cst_58 = arith.constant 1.000000e+00 : f32
    %232 = vector.broadcast %cst_58 : f32 to vector<8x128xf32>
    %233 = arith.addf %232, %231 : vector<8x128xf32>
    %234 = arith.divf %232, %233 : vector<8x128xf32>
    %235 = vector.extract_strided_slice %234 {offsets = [0, 0], sizes = [8, 32], strides = [1, 1]} : vector<8x128xf32> to vector<8x32xf32>
    %236 = vector.extract_strided_slice %234 {offsets = [0, 32], sizes = [8, 32], strides = [1, 1]} : vector<8x128xf32> to vector<8x32xf32>
    %237 = vector.extract_strided_slice %234 {offsets = [0, 96], sizes = [8, 32], strides = [1, 1]} : vector<8x128xf32> to vector<8x32xf32>
    %238 = vector.extract_strided_slice %229 {offsets = [0, 64], sizes = [8, 32], strides = [1, 1]} : vector<8x128xf32> to vector<8x32xf32>
    %239 = math.tanh %238 : vector<8x32xf32>
    %240 = arith.mulf %236, %223 : vector<8x32xf32>
    %241 = arith.mulf %235, %239 : vector<8x32xf32>
    %242 = arith.addf %240, %241 : vector<8x32xf32>
    %243 = math.tanh %242 : vector<8x32xf32>
    %244 = arith.mulf %237, %243 : vector<8x32xf32>
    %c24_59 = arith.constant 24 : index
    %c0_60 = arith.constant 0 : index
    %245 = vector.load %arg12[%c24_59, %c0_60] : memref<64x32xf32, #tpu.memory_space<vmem>>, vector<8x32xf32>
    tpu.vector_store %arg12[%c24_59, %c0_60], %244 {strides = array<i32>} : memref<64x32xf32, #tpu.memory_space<vmem>>, vector<8x32xf32>,
    %246 = vector.extract_strided_slice %167 {offsets = [32, 0], sizes = [8, 128], strides = [1, 1]} : vector<64x128xf32> to vector<8x128xf32>
    %cst_61 = arith.constant dense<0.000000e+00> : vector<8x128xf32>
    %247 = tpu.matmul %244, %163, %cst_61 {dimension_numbers = #tpu.dot_dimension_numbers<[1], [0], [0], [1], [0, 0, 1, 1], [], []>} : vector<8x32xf32>, vector<32x128xf32>, vector<8x128xf32> -> vector<8x128xf32>
    %248 = arith.addf %246, %247 : vector<8x128xf32>
    %249 = arith.negf %248 : vector<8x128xf32>
    %250 = math.exp %249 : vector<8x128xf32>
    %cst_62 = arith.constant 1.000000e+00 : f32
    %251 = vector.broadcast %cst_62 : f32 to vector<8x128xf32>
    %252 = arith.addf %251, %250 : vector<8x128xf32>
    %253 = arith.divf %251, %252 : vector<8x128xf32>
    %254 = vector.extract_strided_slice %253 {offsets = [0, 0], sizes = [8, 32], strides = [1, 1]} : vector<8x128xf32> to vector<8x32xf32>
    %255 = vector.extract_strided_slice %253 {offsets = [0, 32], sizes = [8, 32], strides = [1, 1]} : vector<8x128xf32> to vector<8x32xf32>
    %256 = vector.extract_strided_slice %253 {offsets = [0, 96], sizes = [8, 32], strides = [1, 1]} : vector<8x128xf32> to vector<8x32xf32>
    %257 = vector.extract_strided_slice %248 {offsets = [0, 64], sizes = [8, 32], strides = [1, 1]} : vector<8x128xf32> to vector<8x32xf32>
    %258 = math.tanh %257 : vector<8x32xf32>
    %259 = arith.mulf %255, %242 : vector<8x32xf32>
    %260 = arith.mulf %254, %258 : vector<8x32xf32>
    %261 = arith.addf %259, %260 : vector<8x32xf32>
    %262 = math.tanh %261 : vector<8x32xf32>
    %263 = arith.mulf %256, %262 : vector<8x32xf32>
    %c32_63 = arith.constant 32 : index
    %c0_64 = arith.constant 0 : index
    %264 = vector.load %arg12[%c32_63, %c0_64] : memref<64x32xf32, #tpu.memory_space<vmem>>, vector<8x32xf32>
    tpu.vector_store %arg12[%c32_63, %c0_64], %263 {strides = array<i32>} : memref<64x32xf32, #tpu.memory_space<vmem>>, vector<8x32xf32>,
    %265 = vector.extract_strided_slice %167 {offsets = [40, 0], sizes = [8, 128], strides = [1, 1]} : vector<64x128xf32> to vector<8x128xf32>
    %cst_65 = arith.constant dense<0.000000e+00> : vector<8x128xf32>
    %266 = tpu.matmul %263, %163, %cst_65 {dimension_numbers = #tpu.dot_dimension_numbers<[1], [0], [0], [1], [0, 0, 1, 1], [], []>} : vector<8x32xf32>, vector<32x128xf32>, vector<8x128xf32> -> vector<8x128xf32>
    %267 = arith.addf %265, %266 : vector<8x128xf32>
    %268 = arith.negf %267 : vector<8x128xf32>
    %269 = math.exp %268 : vector<8x128xf32>
    %cst_66 = arith.constant 1.000000e+00 : f32
    %270 = vector.broadcast %cst_66 : f32 to vector<8x128xf32>
    %271 = arith.addf %270, %269 : vector<8x128xf32>
    %272 = arith.divf %270, %271 : vector<8x128xf32>
    %273 = vector.extract_strided_slice %272 {offsets = [0, 0], sizes = [8, 32], strides = [1, 1]} : vector<8x128xf32> to vector<8x32xf32>
    %274 = vector.extract_strided_slice %272 {offsets = [0, 32], sizes = [8, 32], strides = [1, 1]} : vector<8x128xf32> to vector<8x32xf32>
    %275 = vector.extract_strided_slice %272 {offsets = [0, 96], sizes = [8, 32], strides = [1, 1]} : vector<8x128xf32> to vector<8x32xf32>
    %276 = vector.extract_strided_slice %267 {offsets = [0, 64], sizes = [8, 32], strides = [1, 1]} : vector<8x128xf32> to vector<8x32xf32>
    %277 = math.tanh %276 : vector<8x32xf32>
    %278 = arith.mulf %274, %261 : vector<8x32xf32>
    %279 = arith.mulf %273, %277 : vector<8x32xf32>
    %280 = arith.addf %278, %279 : vector<8x32xf32>
    %281 = math.tanh %280 : vector<8x32xf32>
    %282 = arith.mulf %275, %281 : vector<8x32xf32>
    %c40_67 = arith.constant 40 : index
    %c0_68 = arith.constant 0 : index
    %283 = vector.load %arg12[%c40_67, %c0_68] : memref<64x32xf32, #tpu.memory_space<vmem>>, vector<8x32xf32>
    tpu.vector_store %arg12[%c40_67, %c0_68], %282 {strides = array<i32>} : memref<64x32xf32, #tpu.memory_space<vmem>>, vector<8x32xf32>,
    %284 = vector.extract_strided_slice %167 {offsets = [48, 0], sizes = [8, 128], strides = [1, 1]} : vector<64x128xf32> to vector<8x128xf32>
    %cst_69 = arith.constant dense<0.000000e+00> : vector<8x128xf32>
    %285 = tpu.matmul %282, %163, %cst_69 {dimension_numbers = #tpu.dot_dimension_numbers<[1], [0], [0], [1], [0, 0, 1, 1], [], []>} : vector<8x32xf32>, vector<32x128xf32>, vector<8x128xf32> -> vector<8x128xf32>
    %286 = arith.addf %284, %285 : vector<8x128xf32>
    %287 = arith.negf %286 : vector<8x128xf32>
    %288 = math.exp %287 : vector<8x128xf32>
    %cst_70 = arith.constant 1.000000e+00 : f32
    %289 = vector.broadcast %cst_70 : f32 to vector<8x128xf32>
    %290 = arith.addf %289, %288 : vector<8x128xf32>
    %291 = arith.divf %289, %290 : vector<8x128xf32>
    %292 = vector.extract_strided_slice %291 {offsets = [0, 0], sizes = [8, 32], strides = [1, 1]} : vector<8x128xf32> to vector<8x32xf32>
    %293 = vector.extract_strided_slice %291 {offsets = [0, 32], sizes = [8, 32], strides = [1, 1]} : vector<8x128xf32> to vector<8x32xf32>
    %294 = vector.extract_strided_slice %291 {offsets = [0, 96], sizes = [8, 32], strides = [1, 1]} : vector<8x128xf32> to vector<8x32xf32>
    %295 = vector.extract_strided_slice %286 {offsets = [0, 64], sizes = [8, 32], strides = [1, 1]} : vector<8x128xf32> to vector<8x32xf32>
    %296 = math.tanh %295 : vector<8x32xf32>
    %297 = arith.mulf %293, %280 : vector<8x32xf32>
    %298 = arith.mulf %292, %296 : vector<8x32xf32>
    %299 = arith.addf %297, %298 : vector<8x32xf32>
    %300 = math.tanh %299 : vector<8x32xf32>
    %301 = arith.mulf %294, %300 : vector<8x32xf32>
    %c48_71 = arith.constant 48 : index
    %c0_72 = arith.constant 0 : index
    %302 = vector.load %arg12[%c48_71, %c0_72] : memref<64x32xf32, #tpu.memory_space<vmem>>, vector<8x32xf32>
    tpu.vector_store %arg12[%c48_71, %c0_72], %301 {strides = array<i32>} : memref<64x32xf32, #tpu.memory_space<vmem>>, vector<8x32xf32>,
    %303 = vector.extract_strided_slice %167 {offsets = [56, 0], sizes = [8, 128], strides = [1, 1]} : vector<64x128xf32> to vector<8x128xf32>
    %cst_73 = arith.constant dense<0.000000e+00> : vector<8x128xf32>
    %304 = tpu.matmul %301, %163, %cst_73 {dimension_numbers = #tpu.dot_dimension_numbers<[1], [0], [0], [1], [0, 0, 1, 1], [], []>} : vector<8x32xf32>, vector<32x128xf32>, vector<8x128xf32> -> vector<8x128xf32>
    %305 = arith.addf %303, %304 : vector<8x128xf32>
    %306 = arith.negf %305 : vector<8x128xf32>
    %307 = math.exp %306 : vector<8x128xf32>
    %cst_74 = arith.constant 1.000000e+00 : f32
    %308 = vector.broadcast %cst_74 : f32 to vector<8x128xf32>
    %309 = arith.addf %308, %307 : vector<8x128xf32>
    %310 = arith.divf %308, %309 : vector<8x128xf32>
    %311 = vector.extract_strided_slice %310 {offsets = [0, 0], sizes = [8, 32], strides = [1, 1]} : vector<8x128xf32> to vector<8x32xf32>
    %312 = vector.extract_strided_slice %310 {offsets = [0, 32], sizes = [8, 32], strides = [1, 1]} : vector<8x128xf32> to vector<8x32xf32>
    %313 = vector.extract_strided_slice %310 {offsets = [0, 96], sizes = [8, 32], strides = [1, 1]} : vector<8x128xf32> to vector<8x32xf32>
    %314 = vector.extract_strided_slice %305 {offsets = [0, 64], sizes = [8, 32], strides = [1, 1]} : vector<8x128xf32> to vector<8x32xf32>
    %315 = math.tanh %314 : vector<8x32xf32>
    %316 = arith.mulf %312, %299 : vector<8x32xf32>
    %317 = arith.mulf %311, %315 : vector<8x32xf32>
    %318 = arith.addf %316, %317 : vector<8x32xf32>
    %319 = math.tanh %318 : vector<8x32xf32>
    %320 = arith.mulf %313, %319 : vector<8x32xf32>
    %c56_75 = arith.constant 56 : index
    %c0_76 = arith.constant 0 : index
    %321 = vector.load %arg12[%c56_75, %c0_76] : memref<64x32xf32, #tpu.memory_space<vmem>>, vector<8x32xf32>
    tpu.vector_store %arg12[%c56_75, %c0_76], %320 {strides = array<i32>} : memref<64x32xf32, #tpu.memory_space<vmem>>, vector<8x32xf32>,
    %c0_77 = arith.constant 0 : index
    %c0_78 = arith.constant 0 : index
    %322 = vector.load %arg12[%c0_77, %c0_78] : memref<64x32xf32, #tpu.memory_space<vmem>>, vector<64x32xf32>
    %c0_79 = arith.constant 0 : index
    %c0_80 = arith.constant 0 : index
    %323 = vector.load %arg7[%c0_79, %c0_80] : memref<32x32xf32, #tpu.memory_space<vmem>>, vector<32x32xf32>
    %cst_81 = arith.constant dense<0.000000e+00> : vector<64x32xf32>
    %324 = tpu.matmul %322, %323, %cst_81 {dimension_numbers = #tpu.dot_dimension_numbers<[1], [0], [0], [1], [0, 0, 1, 1], [], []>} : vector<64x32xf32>, vector<32x32xf32>, vector<64x32xf32> -> vector<64x32xf32>
    %c0_82 = arith.constant 0 : index
    %c0_83 = arith.constant 0 : index
    %325 = vector.load %arg8[%c0_82, %c0_83] : memref<1x32xf32, #tpu.memory_space<vmem>>, vector<1x32xf32>
    %326 = vector.broadcast %325 : vector<1x32xf32> to vector<64x32xf32>
    %327 = arith.addf %324, %326 : vector<64x32xf32>
    %328 = math.tanh %327 : vector<64x32xf32>
    %c0_84 = arith.constant 0 : index
    %c0_85 = arith.constant 0 : index
    %329 = vector.load %arg9[%c0_84, %c0_85] : memref<32x4xf32, #tpu.memory_space<vmem>>, vector<32x4xf32>
    %cst_86 = arith.constant dense<0.000000e+00> : vector<64x4xf32>
    %330 = tpu.matmul %328, %329, %cst_86 {dimension_numbers = #tpu.dot_dimension_numbers<[1], [0], [0], [1], [0, 0, 1, 1], [], []>} : vector<64x32xf32>, vector<32x4xf32>, vector<64x4xf32> -> vector<64x4xf32>
    %c0_87 = arith.constant 0 : index
    %c0_88 = arith.constant 0 : index
    %331 = vector.load %arg10[%c0_87, %c0_88] : memref<1x4xf32, #tpu.memory_space<vmem>>, vector<1x4xf32>
    %332 = vector.broadcast %331 : vector<1x4xf32> to vector<64x4xf32>
    %333 = arith.addf %330, %332 : vector<64x4xf32>
    %c0_89 = arith.constant 0 : index
    %c0_90 = arith.constant 0 : index
    %334 = vector.load %arg11[%c0_89, %c0_90] : memref<64x4xf32, #tpu.memory_space<vmem>>, vector<64x4xf32>
    tpu.vector_store %arg11[%c0_89, %c0_90], %333 {strides = array<i32>} : memref<64x4xf32, #tpu.memory_space<vmem>>, vector<64x4xf32>,
    return
  }
}

</mosaic_0001>

<llo_original>
// kernel: tpu_custom_call.1
$region0: #{tpu_custom_call.1}
  #allocation0 [shape = 'u32[]', space=smem, size = 0x4, offset = 0x4, fixed_abs, tag = 'smem constant byte address 0x4 - core index']
  #allocation1 [shape = 'u32[144,128]{1,0:T(1,128)}', space=vmem, size = 0x12000, scoped, tag = 'internal scratch']
  #allocation2 [shape = 'f32[64,32]{1,0:T(8,128)}', space=vmem, size = 0x8000, scoped, tag = 'scratch operand']
  %s0 = inlined_call_operand.vmem [shape: f32[64,8], index: 0, kind: input, shape index: {}]
  %s1 = inlined_call_operand.vmem [shape: f32[8,128], index: 1, kind: input, shape index: {}]
  %s2 = inlined_call_operand.vmem [shape: f32[32,128], index: 2, kind: input, shape index: {}]
  %s3 = inlined_call_operand.vmem [shape: f32[1,128], index: 3, kind: input, shape index: {}]
  %s4 = inlined_call_operand.vmem [shape: f32[32,128], index: 4, kind: input, shape index: {}]
  %s5 = inlined_call_operand.vmem [shape: f32[32,128], index: 5, kind: input, shape index: {}]
  %s6 = inlined_call_operand.vmem [shape: f32[1,128], index: 6, kind: input, shape index: {}]
  %s7 = inlined_call_operand.hbm [shape: f32[32,32], index: 7, kind: input, shape index: {}]
  %s8 = inlined_call_operand.vmem [shape: f32[1,32], index: 8, kind: input, shape index: {}]
  %s9 = inlined_call_operand.vmem [shape: f32[32,4], index: 9, kind: input, shape index: {}]
  %s10 = inlined_call_operand.vmem [shape: f32[1,4], index: 10, kind: input, shape index: {}]
  %s11 = inlined_call_operand.vmem [shape: f32[64,4], index: 11, kind: output, shape index: {}]
  %s12 = sld [smem:[#allocation0]]
  $region58: #{tpu_custom_call.1} parent=0
    _
  %s14 = ssub.s32 1, %s12
  %s15 = scalar_select 0, %s14, %s12
  $region1: #{tpu_custom_call.1} parent=0
    #allocation3 [shape = 'u8[16384]{0}', space=vmem, size = 0x4000, scoped, tag = 'input window, operand 7, single buffered']
    #allocation4 [shape = 's32[1]{0}', space=sflag, size = 0x4, scoped, tag = 'scoped memory for tpu_custom_call.1']
    %16 = vsyncpa [#allocation4], 0
    // Predicated region
    $region2: #{tpu_custom_call.1} parent=1 // pred_check
      _
    $region3: #{tpu_custom_call.1} parent=1 // pred_check_branch
      %18 = sbr.rel (0) target = $region5
    $region4: #{tpu_custom_call.1} parent=1 // pred_region
      _
    $region5: #{tpu_custom_call.1} parent=1 // pred_fallthru
      _
    // Predicated region
    $region6: #{tpu_custom_call.1} parent=1 // pred_check
      _
    $region7: #{tpu_custom_call.1} parent=1 // pred_check_branch
      %20 = sbr.rel (0) target = $region9
    $region8: #{tpu_custom_call.1} parent=1 // pred_region
      _
    $region9: #{tpu_custom_call.1} parent=1 // pred_fallthru
      _
    // Predicated region
    $region10: #{tpu_custom_call.1} parent=1 // pred_check
      _
    $region11: #{tpu_custom_call.1} parent=1 // pred_check_branch
      %22 = sbr.rel (0) target = $region13
    $region12: #{tpu_custom_call.1} parent=1 // pred_region
      _
    $region13: #{tpu_custom_call.1} parent=1 // pred_fallthru
      _
    // Predicated region
    $region14: #{tpu_custom_call.1} parent=1 // pred_check
      _
    $region15: #{tpu_custom_call.1} parent=1 // pred_check_branch
      %24 = sbr.rel (0) target = $region17
    $region16: #{tpu_custom_call.1} parent=1 // pred_region
      _
    $region17: #{tpu_custom_call.1} parent=1 // pred_fallthru
      _
    // Predicated region
    $region18: #{tpu_custom_call.1} parent=1 // pred_check
      _
    $region19: #{tpu_custom_call.1} parent=1 // pred_check_branch
      %26 = sbr.rel (0) target = $region21
    $region20: #{tpu_custom_call.1} parent=1 // pred_region
      _
    $region21: #{tpu_custom_call.1} parent=1 // pred_fallthru
      _
    // Predicated region
    $region22: #{tpu_custom_call.1} parent=1 // pred_check
      _
    $region23: #{tpu_custom_call.1} parent=1 // pred_check_branch
      %28 = sbr.rel (0) target = $region25
    $region24: #{tpu_custom_call.1} parent=1 // pred_region
      _
    $region25: #{tpu_custom_call.1} parent=1 // pred_fallthru
      _
    // Predicated region
    $region26: #{tpu_custom_call.1} parent=1 // pred_check
      _
    $region27: #{tpu_custom_call.1} parent=1 // pred_check_branch
      %30 = sbr.rel (0) target = $region29
    $region28: #{tpu_custom_call.1} parent=1 // pred_region
      _
    $region29: #{tpu_custom_call.1} parent=1 // pred_fallthru
      _
    // Predicated region
    $region30: #{tpu_custom_call.1} parent=1 // pred_check
      _
    $region31: #{tpu_custom_call.1} parent=1 // pred_check_branch
      %32 = sbr.rel (0) target = $region33
    $region32: #{tpu_custom_call.1} parent=1 // pred_region
      %s34 = ssub.s32 512, 512
      %35 = vsyncadd [#allocation4], %s34
      %s36 = sshll.u32 [#allocation3], 4
      %s37 = int_to_ptr.vmem [resolvable:$true] %s36
      %42 = dma.hbm_to_vmem [thread:$0]  %s7, 512, %s37, [#allocation4], 128, 128, 8
    $region33: #{tpu_custom_call.1} parent=1 // pred_fallthru
      _
    // Predicated region
    $region34: #{tpu_custom_call.1} parent=1 // pred_check
      _
    $region35: #{tpu_custom_call.1} parent=1 // pred_check_branch
      %44 = sbr.rel (0) target = $region37
    $region36: #{tpu_custom_call.1} parent=1 // pred_region
      _
    $region37: #{tpu_custom_call.1} parent=1 // pred_fallthru
      _
    // Predicated region
    $region38: #{tpu_custom_call.1} parent=1 // pred_check
      _
    $region39: #{tpu_custom_call.1} parent=1 // pred_check_branch
      %46 = sbr.rel (0) target = $region41
    $region40: #{tpu_custom_call.1} parent=1 // pred_region
      _
    $region41: #{tpu_custom_call.1} parent=1 // pred_fallthru
      _
    // Predicated region
    $region42: #{tpu_custom_call.1} parent=1 // pred_check
      _
    $region43: #{tpu_custom_call.1} parent=1 // pred_check_branch
      %48 = sbr.rel (0) target = $region45
    $region44: #{tpu_custom_call.1} parent=1 // pred_region
      _
    $region45: #{tpu_custom_call.1} parent=1 // pred_fallthru
      _
    // Predicated region
    $region46: #{tpu_custom_call.1} parent=1 // pred_check
      _
    $region47: #{tpu_custom_call.1} parent=1 // pred_check_branch
      %50 = sbr.rel (0) target = $region49
    $region48: #{tpu_custom_call.1} parent=1 // pred_region
      %51 = dma.done [#allocation4], 512
    $region49: #{tpu_custom_call.1} parent=1 // pred_fallthru
      _
    %v52 = vld [vmem:[%s0] sm:$0xff]
    %v53 = vld [vmem:[%s0 + $0x8] sm:$0xff]
    %v54 = vld [vmem:[%s0 + $0x10] sm:$0xff]
    %v55 = vld [vmem:[%s0 + $0x18] sm:$0xff]
    %v56 = vld [vmem:[%s0 + $0x20] sm:$0xff]
    %v57 = vld [vmem:[%s0 + $0x28] sm:$0xff]
    %v58 = vld [vmem:[%s0 + $0x30] sm:$0xff]
    %v59 = vld [vmem:[%s0 + $0x38] sm:$0xff]
    %v60 = vld [vmem:[%s1] sm:$0xff]
    %v61 = vld [vmem:[%s2] sm:$0xff]
    %v62 = vld [vmem:[%s2 + $0x8] sm:$0xff]
    %v63 = vld [vmem:[%s2 + $0x10] sm:$0xff]
    %v64 = vld [vmem:[%s2 + $0x18] sm:$0xff]
    %v65 = vld [vmem:[%s3] sm:$0x1]
    %v67 = vlaneseq
    %v68 = vshrl.u32 %v67, 7
    %v69 = vsub.s32 0, %v68
    %v70 = vrot.slane %v65, %v69
    %vm72 = vcmask 64512
    %v74 = vsel %vm72, %v52, 0
    %v77 = vsel %vm72, %v53, 0
    %v80 = vsel %vm72, %v54, 0
    %v83 = vsel %vm72, %v55, 0
    %v86 = vsel %vm72, %v56, 0
    %v89 = vsel %vm72, %v57, 0
    %v92 = vsel %vm72, %v58, 0
    %v95 = vsel %vm72, %v59, 0
    %97 = vmatprep.subr.mxu0 0.0
    %98 = vmatpush1.msra.mxu0 0.0
    %99 = vmatprep.subr.mxu0 0.0
    %100 = vmatpush1.msra.mxu0 0.0
    %101 = vmatprep.subr.mxu0 0.0
    %102 = vmatpush1.msra.mxu0 0.0
    %103 = vmatprep.subr.mxu0 0.0
    %104 = vmatpush1.msra.mxu0 0.0
    %105 = vmatprep.subr.mxu0 0.0
    %106 = vmatpush1.msra.mxu0 0.0
    %107 = vmatprep.subr.mxu0 0.0
    %108 = vmatpush1.msra.mxu0 0.0
    %109 = vmatprep.subr.mxu0 0.0
    %110 = vmatpush1.msra.mxu0 0.0
    %111 = vmatprep.subr.mxu0 0.0
    %112 = vmatpush1.msra.mxu0 0.0
    %113 = vmatprep.subr.mxu0 0.0
    %114 = vmatpush1.msra.mxu0 0.0
    %115 = vmatprep.subr.mxu0 0.0
    %116 = vmatpush1.msra.mxu0 0.0
    %117 = vmatprep.subr.mxu0 0.0
    %118 = vmatpush1.msra.mxu0 0.0
    %119 = vmatprep.subr.mxu0 0.0
    %120 = vmatpush1.msra.mxu0 0.0
    %121 = vmatprep.subr.mxu0 0.0
    %122 = vmatpush1.msra.mxu0 0.0
    %123 = vmatprep.subr.mxu0 0.0
    %124 = vmatpush1.msra.mxu0 0.0
    %125 = vmatprep.subr.mxu0 0.0
    %126 = vmatpush1.msra.mxu0 0.0
    %127 = vmatprep.subr.mxu0 0.0
    %128 = vmatpush1.msra.mxu0 %v60
    %129 = vmatprep.subr.mxu0 0.0
    %130 = vmatpush2.msra.mxu0 0.0
    %131 = vmatprep.subr.mxu0 0.0
    %132 = vmatpush2.msra.mxu0 0.0
    %133 = vmatprep.subr.mxu0 0.0
    %134 = vmatpush2.msra.mxu0 0.0
    %135 = vmatprep.subr.mxu0 0.0
    %136 = vmatpush2.msra.mxu0 0.0
    %137 = vmatprep.subr.mxu0 0.0
    %138 = vmatpush2.msra.mxu0 0.0
    %139 = vmatprep.subr.mxu0 0.0
    %140 = vmatpush2.msra.mxu0 0.0
    %141 = vmatprep.subr.mxu0 0.0
    %142 = vmatpush2.msra.mxu0 0.0
    %143 = vmatprep.subr.mxu0 0.0
    %144 = vmatpush2.msra.mxu0 0.0
    %145 = vmatprep.subr.mxu0 0.0
    %146 = vmatpush2.msra.mxu0 0.0
    %147 = vmatprep.subr.mxu0 0.0
    %148 = vmatpush2.msra.mxu0 0.0
    %149 = vmatprep.subr.mxu0 0.0
    %150 = vmatpush2.msra.mxu0 0.0
    %151 = vmatprep.subr.mxu0 0.0
    %152 = vmatpush2.msra.mxu0 0.0
    %153 = vmatprep.subr.mxu0 0.0
    %154 = vmatpush2.msra.mxu0 0.0
    %155 = vmatprep.subr.mxu0 0.0
    %156 = vmatpush2.msra.mxu0 0.0
    %157 = vmatprep.subr.mxu0 0.0
    %158 = vmatpush2.msra.mxu0 0.0
    %159 = vmatprep.subr.mxu0 0.0
    %160 = vmatpush2.msra.mxu0 0.0
    %161 = vmatprep.mubr.f32.mxu0 0.0
    %162 = vmatmul.mubr.f32.gmra.mxu0 %v74
    %v163 = vpop.f32.mrf.mxu0
    %v164 = vadd.f32 %v70, %v163
    %v165 = vpop.f32.mrf.mxu0
    %166 = vmatprep.mubr.f32.mxu0 0.0
    %167 = vmatmul.mubr.f32.gmra.mxu0 %v77
    %v168 = vpop.f32.mrf.mxu0
    %v169 = vadd.f32 %v70, %v168
    %v170 = vpop.f32.mrf.mxu0
    %171 = vmatprep.mubr.f32.mxu0 0.0
    %172 = vmatmul.mubr.f32.gmra.mxu0 %v80
    %v173 = vpop.f32.mrf.mxu0
    %v174 = vadd.f32 %v70, %v173
    %v175 = vpop.f32.mrf.mxu0
    %176 = vmatprep.mubr.f32.mxu0 0.0
    %177 = vmatmul.mubr.f32.gmra.mxu0 %v83
    %v178 = vpop.f32.mrf.mxu0
    %v179 = vadd.f32 %v70, %v178
    %v180 = vpop.f32.mrf.mxu0
    %181 = vmatprep.mubr.f32.mxu0 0.0
    %182 = vmatmul.mubr.f32.gmra.mxu0 %v86
    %v183 = vpop.f32.mrf.mxu0
    %v184 = vadd.f32 %v70, %v183
    %v185 = vpop.f32.mrf.mxu0
    %186 = vmatprep.mubr.f32.mxu0 0.0
    %187 = vmatmul.mubr.f32.gmra.mxu0 %v89
    %v188 = vpop.f32.mrf.mxu0
    %v189 = vadd.f32 %v70, %v188
    %v190 = vpop.f32.mrf.mxu0
    %191 = vmatprep.mubr.f32.mxu0 0.0
    %192 = vmatmul.mubr.f32.gmra.mxu0 %v92
    %v193 = vpop.f32.mrf.mxu0
    %v194 = vadd.f32 %v70, %v193
    %v195 = vpop.f32.mrf.mxu0
    %196 = vmatprep.mubr.f32.mxu0 0.0
    %197 = vmatmul.mubr.f32.gmra.mxu0 %v95
    %v198 = vpop.f32.mrf.mxu0
    %v199 = vadd.f32 %v70, %v198
    %v200 = vpop.f32.mrf.mxu0
    %201 = vdwg.mxu0
    %vm202 = vcmask 261120
    %v204 = vsel %vm202, 0.0, 0
    %206 = vmatprep.subr.mxu0 0.0
    %207 = vmatpush1.msra.mxu0 0.0
    %208 = vmatprep.subr.mxu0 0.0
    %209 = vmatpush1.msra.mxu0 0.0
    %210 = vmatprep.subr.mxu0 0.0
    %211 = vmatpush1.msra.mxu0 0.0
    %212 = vmatprep.subr.mxu0 0.0
    %213 = vmatpush1.msra.mxu0 0.0
    %214 = vmatprep.subr.mxu0 0.0
    %215 = vmatpush1.msra.mxu0 0.0
    %216 = vmatprep.subr.mxu0 0.0
    %217 = vmatpush1.msra.mxu0 0.0
    %218 = vmatprep.subr.mxu0 0.0
    %219 = vmatpush1.msra.mxu0 0.0
    %220 = vmatprep.subr.mxu0 0.0
    %221 = vmatpush1.msra.mxu0 0.0
    %222 = vmatprep.subr.mxu0 0.0
    %223 = vmatpush1.msra.mxu0 0.0
    %224 = vmatprep.subr.mxu0 0.0
    %225 = vmatpush1.msra.mxu0 0.0
    %226 = vmatprep.subr.mxu0 0.0
    %227 = vmatpush1.msra.mxu0 0.0
    %228 = vmatprep.subr.mxu0 0.0
    %229 = vmatpush1.msra.mxu0 0.0
    %230 = vmatprep.subr.mxu0 0.0
    %231 = vmatpush1.msra.mxu0 %v64
    %232 = vmatprep.subr.mxu0 0.0
    %233 = vmatpush1.msra.mxu0 %v63
    %234 = vmatprep.subr.mxu0 0.0
    %235 = vmatpush1.msra.mxu0 %v62
    %236 = vmatprep.subr.mxu0 0.0
    %237 = vmatpush1.msra.mxu0 %v61
    %238 = vmatprep.subr.mxu0 0.0
    %239 = vmatpush2.msra.mxu0 0.0
    %240 = vmatprep.subr.mxu0 0.0
    %241 = vmatpush2.msra.mxu0 0.0
    %242 = vmatprep.subr.mxu0 0.0
    %243 = vmatpush2.msra.mxu0 0.0
    %244 = vmatprep.subr.mxu0 0.0
    %245 = vmatpush2.msra.mxu0 0.0
    %246 = vmatprep.subr.mxu0 0.0
    %247 = vmatpush2.msra.mxu0 0.0
    %248 = vmatprep.subr.mxu0 0.0
    %249 = vmatpush2.msra.mxu0 0.0
    %250 = vmatprep.subr.mxu0 0.0
    %251 = vmatpush2.msra.mxu0 0.0
    %252 = vmatprep.subr.mxu0 0.0
    %253 = vmatpush2.msra.mxu0 0.0
    %254 = vmatprep.subr.mxu0 0.0
    %255 = vmatpush2.msra.mxu0 0.0
    %256 = vmatprep.subr.mxu0 0.0
    %257 = vmatpush2.msra.mxu0 0.0
    %258 = vmatprep.subr.mxu0 0.0
    %259 = vmatpush2.msra.mxu0 0.0
    %260 = vmatprep.subr.mxu0 0.0
    %261 = vmatpush2.msra.mxu0 0.0
    %262 = vmatprep.subr.mxu0 0.0
    %263 = vmatpush2.msra.mxu0 0.0
    %264 = vmatprep.subr.mxu0 0.0
    %265 = vmatpush2.msra.mxu0 0.0
    %266 = vmatprep.subr.mxu0 0.0
    %267 = vmatpush2.msra.mxu0 0.0
    %268 = vmatprep.subr.mxu0 0.0
    %269 = vmatpush2.msra.mxu0 0.0
    %270 = vmatprep.mubr.f32.mxu0 0.0
    %271 = vmatmul.mubr.f32.gmra.mxu0 %v204
    %v272 = vpop.f32.mrf.mxu0
    %v273 = vadd.f32 0.0, %v272
    %v274 = vpop.f32.mrf.mxu0
    %275 = vdwg.mxu0
    %v276 = vadd.f32 %v164, %v273
    %v277 = vxor.u32 %v276, 2147483648
    %v278 = vmul.f32 %v277, 1.442695
    %v279 = vpow.pop %v278
    %v280 = vadd.f32 %v279, 1.0
    %v281 = vrcp.pop %v280
    %v282 = vmul.f32 1.0, %v281
    %v283 = vtanh.pop %v276
    %v284 = vmul.f32 %v282, 0.0
    %286 = vrot.lane.b32.xlu0 %v283, 64
    %v287 = vpop.permute.xlu0 %286
    %v289 = vmul.f32 %v282, %v287
    %291 = vrot.lane.b32.xlu0 %v289, 32
    %v292 = vpop.permute.xlu0 %291
    %v294 = vadd.f32 %v284, %v292
    %v295 = vtanh.pop %v294
    %297 = vrot.lane.b32.xlu0 %v295, 64
    %v298 = vpop.permute.xlu0 %297
    %v300 = vmul.f32 %v282, %v298
    %302 = vrot.lane.b32.xlu0 %v300, 32
    %v303 = vpop.permute.xlu0 %302
    %305 = vst.msk [vmem:[#allocation2] sm:$0xff] %vm202, %v303
    %v306 = vsel %vm202, %v303, 0
    %308 = vmatprep.subr.mxu0 0.0
    %309 = vmatpush1.msra.mxu0 0.0
    %310 = vmatprep.subr.mxu0 0.0
    %311 = vmatpush1.msra.mxu0 0.0
    %312 = vmatprep.subr.mxu0 0.0
    %313 = vmatpush1.msra.mxu0 0.0
    %314 = vmatprep.subr.mxu0 0.0
    %315 = vmatpush1.msra.mxu0 0.0
    %316 = vmatprep.subr.mxu0 0.0
    %317 = vmatpush1.msra.mxu0 0.0
    %318 = vmatprep.subr.mxu0 0.0
    %319 = vmatpush1.msra.mxu0 0.0
    %320 = vmatprep.subr.mxu0 0.0
    %321 = vmatpush1.msra.mxu0 0.0
    %322 = vmatprep.subr.mxu0 0.0
    %323 = vmatpush1.msra.mxu0 0.0
    %324 = vmatprep.subr.mxu0 0.0
    %325 = vmatpush1.msra.mxu0 0.0
    %326 = vmatprep.subr.mxu0 0.0
    %327 = vmatpush1.msra.mxu0 0.0
    %328 = vmatprep.subr.mxu0 0.0
    %329 = vmatpush1.msra.mxu0 0.0
    %330 = vmatprep.subr.mxu0 0.0
    %331 = vmatpush1.msra.mxu0 0.0
    %332 = vmatprep.subr.mxu0 0.0
    %333 = vmatpush1.msra.mxu0 %v64
    %334 = vmatprep.subr.mxu0 0.0
    %335 = vmatpush1.msra.mxu0 %v63
    %336 = vmatprep.subr.mxu0 0.0
    %337 = vmatpush1.msra.mxu0 %v62
    %338 = vmatprep.subr.mxu0 0.0
    %339 = vmatpush1.msra.mxu0 %v61
    %340 = vmatprep.subr.mxu0 0.0
    %341 = vmatpush2.msra.mxu0 0.0
    %342 = vmatprep.subr.mxu0 0.0
    %343 = vmatpush2.msra.mxu0 0.0
    %344 = vmatprep.subr.mxu0 0.0
    %345 = vmatpush2.msra.mxu0 0.0
    %346 = vmatprep.subr.mxu0 0.0
    %347 = vmatpush2.msra.mxu0 0.0
    %348 = vmatprep.subr.mxu0 0.0
    %349 = vmatpush2.msra.mxu0 0.0
    %350 = vmatprep.subr.mxu0 0.0
    %351 = vmatpush2.msra.mxu0 0.0
    %352 = vmatprep.subr.mxu0 0.0
    %353 = vmatpush2.msra.mxu0 0.0
    %354 = vmatprep.subr.mxu0 0.0
    %355 = vmatpush2.msra.mxu0 0.0
    %356 = vmatprep.subr.mxu0 0.0
    %357 = vmatpush2.msra.mxu0 0.0
    %358 = vmatprep.subr.mxu0 0.0
    %359 = vmatpush2.msra.mxu0 0.0
    %360 = vmatprep.subr.mxu0 0.0
    %361 = vmatpush2.msra.mxu0 0.0
    %362 = vmatprep.subr.mxu0 0.0
    %363 = vmatpush2.msra.mxu0 0.0
    %364 = vmatprep.subr.mxu0 0.0
    %365 = vmatpush2.msra.mxu0 0.0
    %366 = vmatprep.subr.mxu0 0.0
    %367 = vmatpush2.msra.mxu0 0.0
    %368 = vmatprep.subr.mxu0 0.0
    %369 = vmatpush2.msra.mxu0 0.0
    %370 = vmatprep.subr.mxu0 0.0
    %371 = vmatpush2.msra.mxu0 0.0
    %372 = vmatprep.mubr.f32.mxu0 0.0
    %373 = vmatmul.mubr.f32.gmra.mxu0 %v306
    %v374 = vpop.f32.mrf.mxu0
    %v375 = vadd.f32 0.0, %v374
    %v376 = vpop.f32.mrf.mxu0
    %377 = vdwg.mxu0
    %v378 = vadd.f32 %v169, %v375
    %v379 = vxor.u32 %v378, 2147483648
    %v380 = vmul.f32 %v379, 1.442695
    %v381 = vpow.pop %v380
    %v382 = vadd.f32 %v381, 1.0
    %v383 = vrcp.pop %v382
    %v384 = vmul.f32 1.0, %v383
    %v385 = vtanh.pop %v378
    %v386 = vmul.f32 %v384, %v294
    %388 = vrot.lane.b32.xlu0 %v385, 64
    %v389 = vpop.permute.xlu0 %388
    %v391 = vmul.f32 %v384, %v389
    %393 = vrot.lane.b32.xlu0 %v391, 32
    %v394 = vpop.permute.xlu0 %393
    %v396 = vadd.f32 %v386, %v394
    %v397 = vtanh.pop %v396
    %399 = vrot.lane.b32.xlu0 %v397, 64
    %v400 = vpop.permute.xlu0 %399
    %v402 = vmul.f32 %v384, %v400
    %404 = vrot.lane.b32.xlu0 %v402, 32
    %v405 = vpop.permute.xlu0 %404
    %407 = vst.msk [vmem:[#allocation2 + $0x8] sm:$0xff] %vm202, %v405
    %v408 = vsel %vm202, %v405, 0
    %410 = vmatprep.subr.mxu0 0.0
    %411 = vmatpush1.msra.mxu0 0.0
    %412 = vmatprep.subr.mxu0 0.0
    %413 = vmatpush1.msra.mxu0 0.0
    %414 = vmatprep.subr.mxu0 0.0
    %415 = vmatpush1.msra.mxu0 0.0
    %416 = vmatprep.subr.mxu0 0.0
    %417 = vmatpush1.msra.mxu0 0.0
    %418 = vmatprep.subr.mxu0 0.0
    %419 = vmatpush1.msra.mxu0 0.0
    %420 = vmatprep.subr.mxu0 0.0
    %421 = vmatpush1.msra.mxu0 0.0
    %422 = vmatprep.subr.mxu0 0.0
    %423 = vmatpush1.msra.mxu0 0.0
    %424 = vmatprep.subr.mxu0 0.0
    %425 = vmatpush1.msra.mxu0 0.0
    %426 = vmatprep.subr.mxu0 0.0
    %427 = vmatpush1.msra.mxu0 0.0
    %428 = vmatprep.subr.mxu0 0.0
    %429 = vmatpush1.msra.mxu0 0.0
    %430 = vmatprep.subr.mxu0 0.0
    %431 = vmatpush1.msra.mxu0 0.0
    %432 = vmatprep.subr.mxu0 0.0
    %433 = vmatpush1.msra.mxu0 0.0
    %434 = vmatprep.subr.mxu0 0.0
    %435 = vmatpush1.msra.mxu0 %v64
    %436 = vmatprep.subr.mxu0 0.0
    %437 = vmatpush1.msra.mxu0 %v63
    %438 = vmatprep.subr.mxu0 0.0
    %439 = vmatpush1.msra.mxu0 %v62
    %440 = vmatprep.subr.mxu0 0.0
    %441 = vmatpush1.msra.mxu0 %v61
    %442 = vmatprep.subr.mxu0 0.0
    %443 = vmatpush2.msra.mxu0 0.0
    %444 = vmatprep.subr.mxu0 0.0
    %445 = vmatpush2.msra.mxu0 0.0
    %446 = vmatprep.subr.mxu0 0.0
    %447 = vmatpush2.msra.mxu0 0.0
    %448 = vmatprep.subr.mxu0 0.0
    %449 = vmatpush2.msra.mxu0 0.0
    %450 = vmatprep.subr.mxu0 0.0
    %451 = vmatpush2.msra.mxu0 0.0
    %452 = vmatprep.subr.mxu0 0.0
    %453 = vmatpush2.msra.mxu0 0.0
    %454 = vmatprep.subr.mxu0 0.0
    %455 = vmatpush2.msra.mxu0 0.0
    %456 = vmatprep.subr.mxu0 0.0
    %457 = vmatpush2.msra.mxu0 0.0
    %458 = vmatprep.subr.mxu0 0.0
    %459 = vmatpush2.msra.mxu0 0.0
    %460 = vmatprep.subr.mxu0 0.0
    %461 = vmatpush2.msra.mxu0 0.0
    %462 = vmatprep.subr.mxu0 0.0
    %463 = vmatpush2.msra.mxu0 0.0
    %464 = vmatprep.subr.mxu0 0.0
    %465 = vmatpush2.msra.mxu0 0.0
    %466 = vmatprep.subr.mxu0 0.0
    %467 = vmatpush2.msra.mxu0 0.0
    %468 = vmatprep.subr.mxu0 0.0
    %469 = vmatpush2.msra.mxu0 0.0
    %470 = vmatprep.subr.mxu0 0.0
    %471 = vmatpush2.msra.mxu0 0.0
    %472 = vmatprep.subr.mxu0 0.0
    %473 = vmatpush2.msra.mxu0 0.0
    %474 = vmatprep.mubr.f32.mxu0 0.0
    %475 = vmatmul.mubr.f32.gmra.mxu0 %v408
    %v476 = vpop.f32.mrf.mxu0
    %v477 = vadd.f32 0.0, %v476
    %v478 = vpop.f32.mrf.mxu0
    %479 = vdwg.mxu0
    %v480 = vadd.f32 %v174, %v477
    %v481 = vxor.u32 %v480, 2147483648
    %v482 = vmul.f32 %v481, 1.442695
    %v483 = vpow.pop %v482
    %v484 = vadd.f32 %v483, 1.0
    %v485 = vrcp.pop %v484
    %v486 = vmul.f32 1.0, %v485
    %v487 = vtanh.pop %v480
    %v488 = vmul.f32 %v486, %v396
    %490 = vrot.lane.b32.xlu0 %v487, 64
    %v491 = vpop.permute.xlu0 %490
    %v493 = vmul.f32 %v486, %v491
    %495 = vrot.lane.b32.xlu0 %v493, 32
    %v496 = vpop.permute.xlu0 %495
    %v498 = vadd.f32 %v488, %v496
    %v499 = vtanh.pop %v498
    %501 = vrot.lane.b32.xlu0 %v499, 64
    %v502 = vpop.permute.xlu0 %501
    %v504 = vmul.f32 %v486, %v502
    %506 = vrot.lane.b32.xlu0 %v504, 32
    %v507 = vpop.permute.xlu0 %506
    %509 = vst.msk [vmem:[#allocation2 + $0x10] sm:$0xff] %vm202, %v507
    %v510 = vsel %vm202, %v507, 0
    %512 = vmatprep.subr.mxu0 0.0
    %513 = vmatpush1.msra.mxu0 0.0
    %514 = vmatprep.subr.mxu0 0.0
    %515 = vmatpush1.msra.mxu0 0.0
    %516 = vmatprep.subr.mxu0 0.0
    %517 = vmatpush1.msra.mxu0 0.0
    %518 = vmatprep.subr.mxu0 0.0
    %519 = vmatpush1.msra.mxu0 0.0
    %520 = vmatprep.subr.mxu0 0.0
    %521 = vmatpush1.msra.mxu0 0.0
    %522 = vmatprep.subr.mxu0 0.0
    %523 = vmatpush1.msra.mxu0 0.0
    %524 = vmatprep.subr.mxu0 0.0
    %525 = vmatpush1.msra.mxu0 0.0
    %526 = vmatprep.subr.mxu0 0.0
    %527 = vmatpush1.msra.mxu0 0.0
    %528 = vmatprep.subr.mxu0 0.0
    %529 = vmatpush1.msra.mxu0 0.0
    %530 = vmatprep.subr.mxu0 0.0
    %531 = vmatpush1.msra.mxu0 0.0
    %532 = vmatprep.subr.mxu0 0.0
    %533 = vmatpush1.msra.mxu0 0.0
    %534 = vmatprep.subr.mxu0 0.0
    %535 = vmatpush1.msra.mxu0 0.0
    %536 = vmatprep.subr.mxu0 0.0
    %537 = vmatpush1.msra.mxu0 %v64
    %538 = vmatprep.subr.mxu0 0.0
    %539 = vmatpush1.msra.mxu0 %v63
    %540 = vmatprep.subr.mxu0 0.0
    %541 = vmatpush1.msra.mxu0 %v62
    %542 = vmatprep.subr.mxu0 0.0
    %543 = vmatpush1.msra.mxu0 %v61
    %544 = vmatprep.subr.mxu0 0.0
    %545 = vmatpush2.msra.mxu0 0.0
    %546 = vmatprep.subr.mxu0 0.0
    %547 = vmatpush2.msra.mxu0 0.0
    %548 = vmatprep.subr.mxu0 0.0
    %549 = vmatpush2.msra.mxu0 0.0
    %550 = vmatprep.subr.mxu0 0.0
    %551 = vmatpush2.msra.mxu0 0.0
    %552 = vmatprep.subr.mxu0 0.0
    %553 = vmatpush2.msra.mxu0 0.0
    %554 = vmatprep.subr.mxu0 0.0
    %555 = vmatpush2.msra.mxu0 0.0
    %556 = vmatprep.subr.mxu0 0.0
    %557 = vmatpush2.msra.mxu0 0.0
    %558 = vmatprep.subr.mxu0 0.0
    %559 = vmatpush2.msra.mxu0 0.0
    %560 = vmatprep.subr.mxu0 0.0
    %561 = vmatpush2.msra.mxu0 0.0
    %562 = vmatprep.subr.mxu0 0.0
    %563 = vmatpush2.msra.mxu0 0.0
    %564 = vmatprep.subr.mxu0 0.0
    %565 = vmatpush2.msra.mxu0 0.0
    %566 = vmatprep.subr.mxu0 0.0
    %567 = vmatpush2.msra.mxu0 0.0
    %568 = vmatprep.subr.mxu0 0.0
    %569 = vmatpush2.msra.mxu0 0.0
    %570 = vmatprep.subr.mxu0 0.0
    %571 = vmatpush2.msra.mxu0 0.0
    %572 = vmatprep.subr.mxu0 0.0
    %573 = vmatpush2.msra.mxu0 0.0
    %574 = vmatprep.subr.mxu0 0.0
    %575 = vmatpush2.msra.mxu0 0.0
    %576 = vmatprep.mubr.f32.mxu0 0.0
    %577 = vmatmul.mubr.f32.gmra.mxu0 %v510
    %v578 = vpop.f32.mrf.mxu0
    %v579 = vadd.f32 0.0, %v578
    %v580 = vpop.f32.mrf.mxu0
    %581 = vdwg.mxu0
    %v582 = vadd.f32 %v179, %v579
    %v583 = vxor.u32 %v582, 2147483648
    %v584 = vmul.f32 %v583, 1.442695
    %v585 = vpow.pop %v584
    %v586 = vadd.f32 %v585, 1.0
    %v587 = vrcp.pop %v586
    %v588 = vmul.f32 1.0, %v587
    %v589 = vtanh.pop %v582
    %v590 = vmul.f32 %v588, %v498
    %592 = vrot.lane.b32.xlu0 %v589, 64
    %v593 = vpop.permute.xlu0 %592
    %v595 = vmul.f32 %v588, %v593
    %597 = vrot.lane.b32.xlu0 %v595, 32
    %v598 = vpop.permute.xlu0 %597
    %v600 = vadd.f32 %v590, %v598
    %v601 = vtanh.pop %v600
    %603 = vrot.lane.b32.xlu0 %v601, 64
    %v604 = vpop.permute.xlu0 %603
    %v606 = vmul.f32 %v588, %v604
    %608 = vrot.lane.b32.xlu0 %v606, 32
    %v609 = vpop.permute.xlu0 %608
    %611 = vst.msk [vmem:[#allocation2 + $0x18] sm:$0xff] %vm202, %v609
    %v612 = vsel %vm202, %v609, 0
    %614 = vmatprep.subr.mxu0 0.0
    %615 = vmatpush1.msra.mxu0 0.0
    %616 = vmatprep.subr.mxu0 0.0
    %617 = vmatpush1.msra.mxu0 0.0
    %618 = vmatprep.subr.mxu0 0.0
    %619 = vmatpush1.msra.mxu0 0.0
    %620 = vmatprep.subr.mxu0 0.0
    %621 = vmatpush1.msra.mxu0 0.0
    %622 = vmatprep.subr.mxu0 0.0
    %623 = vmatpush1.msra.mxu0 0.0
    %624 = vmatprep.subr.mxu0 0.0
    %625 = vmatpush1.msra.mxu0 0.0
    %626 = vmatprep.subr.mxu0 0.0
    %627 = vmatpush1.msra.mxu0 0.0
    %628 = vmatprep.subr.mxu0 0.0
    %629 = vmatpush1.msra.mxu0 0.0
    %630 = vmatprep.subr.mxu0 0.0
    %631 = vmatpush1.msra.mxu0 0.0
    %632 = vmatprep.subr.mxu0 0.0
    %633 = vmatpush1.msra.mxu0 0.0
    %634 = vmatprep.subr.mxu0 0.0
    %635 = vmatpush1.msra.mxu0 0.0
    %636 = vmatprep.subr.mxu0 0.0
    %637 = vmatpush1.msra.mxu0 0.0
    %638 = vmatprep.subr.mxu0 0.0
    %639 = vmatpush1.msra.mxu0 %v64
    %640 = vmatprep.subr.mxu0 0.0
    %641 = vmatpush1.msra.mxu0 %v63
    %642 = vmatprep.subr.mxu0 0.0
    %643 = vmatpush1.msra.mxu0 %v62
    %644 = vmatprep.subr.mxu0 0.0
    %645 = vmatpush1.msra.mxu0 %v61
    %646 = vmatprep.subr.mxu0 0.0
    %647 = vmatpush2.msra.mxu0 0.0
    %648 = vmatprep.subr.mxu0 0.0
    %649 = vmatpush2.msra.mxu0 0.0
    %650 = vmatprep.subr.mxu0 0.0
    %651 = vmatpush2.msra.mxu0 0.0
    %652 = vmatprep.subr.mxu0 0.0
    %653 = vmatpush2.msra.mxu0 0.0
    %654 = vmatprep.subr.mxu0 0.0
    %655 = vmatpush2.msra.mxu0 0.0
    %656 = vmatprep.subr.mxu0 0.0
    %657 = vmatpush2.msra.mxu0 0.0
    %658 = vmatprep.subr.mxu0 0.0
    %659 = vmatpush2.msra.mxu0 0.0
    %660 = vmatprep.subr.mxu0 0.0
    %661 = vmatpush2.msra.mxu0 0.0
    %662 = vmatprep.subr.mxu0 0.0
    %663 = vmatpush2.msra.mxu0 0.0
    %664 = vmatprep.subr.mxu0 0.0
    %665 = vmatpush2.msra.mxu0 0.0
    %666 = vmatprep.subr.mxu0 0.0
    %667 = vmatpush2.msra.mxu0 0.0
    %668 = vmatprep.subr.mxu0 0.0
    %669 = vmatpush2.msra.mxu0 0.0
    %670 = vmatprep.subr.mxu0 0.0
    %671 = vmatpush2.msra.mxu0 0.0
    %672 = vmatprep.subr.mxu0 0.0
    %673 = vmatpush2.msra.mxu0 0.0
    %674 = vmatprep.subr.mxu0 0.0
    %675 = vmatpush2.msra.mxu0 0.0
    %676 = vmatprep.subr.mxu0 0.0
    %677 = vmatpush2.msra.mxu0 0.0
    %678 = vmatprep.mubr.f32.mxu0 0.0
    %679 = vmatmul.mubr.f32.gmra.mxu0 %v612
    %v680 = vpop.f32.mrf.mxu0
    %v681 = vadd.f32 0.0, %v680
    %v682 = vpop.f32.mrf.mxu0
    %683 = vdwg.mxu0
    %v684 = vadd.f32 %v184, %v681
    %v685 = vxor.u32 %v684, 2147483648
    %v686 = vmul.f32 %v685, 1.442695
    %v687 = vpow.pop %v686
    %v688 = vadd.f32 %v687, 1.0
    %v689 = vrcp.pop %v688
    %v690 = vmul.f32 1.0, %v689
    %v691 = vtanh.pop %v684
    %v692 = vmul.f32 %v690, %v600
    %694 = vrot.lane.b32.xlu0 %v691, 64
    %v695 = vpop.permute.xlu0 %694
    %v697 = vmul.f32 %v690, %v695
    %699 = vrot.lane.b32.xlu0 %v697, 32
    %v700 = vpop.permute.xlu0 %699
    %v702 = vadd.f32 %v692, %v700
    %v703 = vtanh.pop %v702
    %705 = vrot.lane.b32.xlu0 %v703, 64
    %v706 = vpop.permute.xlu0 %705
    %v708 = vmul.f32 %v690, %v706
    %710 = vrot.lane.b32.xlu0 %v708, 32
    %v711 = vpop.permute.xlu0 %710
    %713 = vst.msk [vmem:[#allocation2 + $0x20] sm:$0xff] %vm202, %v711
    %v714 = vsel %vm202, %v711, 0
    %716 = vmatprep.subr.mxu0 0.0
    %717 = vmatpush1.msra.mxu0 0.0
    %718 = vmatprep.subr.mxu0 0.0
    %719 = vmatpush1.msra.mxu0 0.0
    %720 = vmatprep.subr.mxu0 0.0
    %721 = vmatpush1.msra.mxu0 0.0
    %722 = vmatprep.subr.mxu0 0.0
    %723 = vmatpush1.msra.mxu0 0.0
    %724 = vmatprep.subr.mxu0 0.0
    %725 = vmatpush1.msra.mxu0 0.0
    %726 = vmatprep.subr.mxu0 0.0
    %727 = vmatpush1.msra.mxu0 0.0
    %728 = vmatprep.subr.mxu0 0.0
    %729 = vmatpush1.msra.mxu0 0.0
    %730 = vmatprep.subr.mxu0 0.0
    %731 = vmatpush1.msra.mxu0 0.0
    %732 = vmatprep.subr.mxu0 0.0
    %733 = vmatpush1.msra.mxu0 0.0
    %734 = vmatprep.subr.mxu0 0.0
    %735 = vmatpush1.msra.mxu0 0.0
    %736 = vmatprep.subr.mxu0 0.0
    %737 = vmatpush1.msra.mxu0 0.0
    %738 = vmatprep.subr.mxu0 0.0
    %739 = vmatpush1.msra.mxu0 0.0
    %740 = vmatprep.subr.mxu0 0.0
    %741 = vmatpush1.msra.mxu0 %v64
    %742 = vmatprep.subr.mxu0 0.0
    %743 = vmatpush1.msra.mxu0 %v63
    %744 = vmatprep.subr.mxu0 0.0
    %745 = vmatpush1.msra.mxu0 %v62
    %746 = vmatprep.subr.mxu0 0.0
    %747 = vmatpush1.msra.mxu0 %v61
    %748 = vmatprep.subr.mxu0 0.0
    %749 = vmatpush2.msra.mxu0 0.0
    %750 = vmatprep.subr.mxu0 0.0
    %751 = vmatpush2.msra.mxu0 0.0
    %752 = vmatprep.subr.mxu0 0.0
    %753 = vmatpush2.msra.mxu0 0.0
    %754 = vmatprep.subr.mxu0 0.0
    %755 = vmatpush2.msra.mxu0 0.0
    %756 = vmatprep.subr.mxu0 0.0
    %757 = vmatpush2.msra.mxu0 0.0
    %758 = vmatprep.subr.mxu0 0.0
    %759 = vmatpush2.msra.mxu0 0.0
    %760 = vmatprep.subr.mxu0 0.0
    %761 = vmatpush2.msra.mxu0 0.0
    %762 = vmatprep.subr.mxu0 0.0
    %763 = vmatpush2.msra.mxu0 0.0
    %764 = vmatprep.subr.mxu0 0.0
    %765 = vmatpush2.msra.mxu0 0.0
    %766 = vmatprep.subr.mxu0 0.0
    %767 = vmatpush2.msra.mxu0 0.0
    %768 = vmatprep.subr.mxu0 0.0
    %769 = vmatpush2.msra.mxu0 0.0
    %770 = vmatprep.subr.mxu0 0.0
    %771 = vmatpush2.msra.mxu0 0.0
    %772 = vmatprep.subr.mxu0 0.0
    %773 = vmatpush2.msra.mxu0 0.0
    %774 = vmatprep.subr.mxu0 0.0
    %775 = vmatpush2.msra.mxu0 0.0
    %776 = vmatprep.subr.mxu0 0.0
    %777 = vmatpush2.msra.mxu0 0.0
    %778 = vmatprep.subr.mxu0 0.0
    %779 = vmatpush2.msra.mxu0 0.0
    %780 = vmatprep.mubr.f32.mxu0 0.0
    %781 = vmatmul.mubr.f32.gmra.mxu0 %v714
    %v782 = vpop.f32.mrf.mxu0
    %v783 = vadd.f32 0.0, %v782
    %v784 = vpop.f32.mrf.mxu0
    %785 = vdwg.mxu0
    %v786 = vadd.f32 %v189, %v783
    %v787 = vxor.u32 %v786, 2147483648
    %v788 = vmul.f32 %v787, 1.442695
    %v789 = vpow.pop %v788
    %v790 = vadd.f32 %v789, 1.0
    %v791 = vrcp.pop %v790
    %v792 = vmul.f32 1.0, %v791
    %v793 = vtanh.pop %v786
    %v794 = vmul.f32 %v792, %v702
    %796 = vrot.lane.b32.xlu0 %v793, 64
    %v797 = vpop.permute.xlu0 %796
    %v799 = vmul.f32 %v792, %v797
    %801 = vrot.lane.b32.xlu0 %v799, 32
    %v802 = vpop.permute.xlu0 %801
    %v804 = vadd.f32 %v794, %v802
    %v805 = vtanh.pop %v804
    %807 = vrot.lane.b32.xlu0 %v805, 64
    %v808 = vpop.permute.xlu0 %807
    %v810 = vmul.f32 %v792, %v808
    %812 = vrot.lane.b32.xlu0 %v810, 32
    %v813 = vpop.permute.xlu0 %812
    %815 = vst.msk [vmem:[#allocation2 + $0x28] sm:$0xff] %vm202, %v813
    %v816 = vsel %vm202, %v813, 0
    %818 = vmatprep.subr.mxu0 0.0
    %819 = vmatpush1.msra.mxu0 0.0
    %820 = vmatprep.subr.mxu0 0.0
    %821 = vmatpush1.msra.mxu0 0.0
    %822 = vmatprep.subr.mxu0 0.0
    %823 = vmatpush1.msra.mxu0 0.0
    %824 = vmatprep.subr.mxu0 0.0
    %825 = vmatpush1.msra.mxu0 0.0
    %826 = vmatprep.subr.mxu0 0.0
    %827 = vmatpush1.msra.mxu0 0.0
    %828 = vmatprep.subr.mxu0 0.0
    %829 = vmatpush1.msra.mxu0 0.0
    %830 = vmatprep.subr.mxu0 0.0
    %831 = vmatpush1.msra.mxu0 0.0
    %832 = vmatprep.subr.mxu0 0.0
    %833 = vmatpush1.msra.mxu0 0.0
    %834 = vmatprep.subr.mxu0 0.0
    %835 = vmatpush1.msra.mxu0 0.0
    %836 = vmatprep.subr.mxu0 0.0
    %837 = vmatpush1.msra.mxu0 0.0
    %838 = vmatprep.subr.mxu0 0.0
    %839 = vmatpush1.msra.mxu0 0.0
    %840 = vmatprep.subr.mxu0 0.0
    %841 = vmatpush1.msra.mxu0 0.0
    %842 = vmatprep.subr.mxu0 0.0
    %843 = vmatpush1.msra.mxu0 %v64
    %844 = vmatprep.subr.mxu0 0.0
    %845 = vmatpush1.msra.mxu0 %v63
    %846 = vmatprep.subr.mxu0 0.0
    %847 = vmatpush1.msra.mxu0 %v62
    %848 = vmatprep.subr.mxu0 0.0
    %849 = vmatpush1.msra.mxu0 %v61
    %850 = vmatprep.subr.mxu0 0.0
    %851 = vmatpush2.msra.mxu0 0.0
    %852 = vmatprep.subr.mxu0 0.0
    %853 = vmatpush2.msra.mxu0 0.0
    %854 = vmatprep.subr.mxu0 0.0
    %855 = vmatpush2.msra.mxu0 0.0
    %856 = vmatprep.subr.mxu0 0.0
    %857 = vmatpush2.msra.mxu0 0.0
    %858 = vmatprep.subr.mxu0 0.0
    %859 = vmatpush2.msra.mxu0 0.0
    %860 = vmatprep.subr.mxu0 0.0
    %861 = vmatpush2.msra.mxu0 0.0
    %862 = vmatprep.subr.mxu0 0.0
    %863 = vmatpush2.msra.mxu0 0.0
    %864 = vmatprep.subr.mxu0 0.0
    %865 = vmatpush2.msra.mxu0 0.0
    %866 = vmatprep.subr.mxu0 0.0
    %867 = vmatpush2.msra.mxu0 0.0
    %868 = vmatprep.subr.mxu0 0.0
    %869 = vmatpush2.msra.mxu0 0.0
    %870 = vmatprep.subr.mxu0 0.0
    %871 = vmatpush2.msra.mxu0 0.0
    %872 = vmatprep.subr.mxu0 0.0
    %873 = vmatpush2.msra.mxu0 0.0
    %874 = vmatprep.subr.mxu0 0.0
    %875 = vmatpush2.msra.mxu0 0.0
    %876 = vmatprep.subr.mxu0 0.0
    %877 = vmatpush2.msra.mxu0 0.0
    %878 = vmatprep.subr.mxu0 0.0
    %879 = vmatpush2.msra.mxu0 0.0
    %880 = vmatprep.subr.mxu0 0.0
    %881 = vmatpush2.msra.mxu0 0.0
    %882 = vmatprep.mubr.f32.mxu0 0.0
    %883 = vmatmul.mubr.f32.gmra.mxu0 %v816
    %v884 = vpop.f32.mrf.mxu0
    %v885 = vadd.f32 0.0, %v884
    %v886 = vpop.f32.mrf.mxu0
    %887 = vdwg.mxu0
    %v888 = vadd.f32 %v194, %v885
    %v889 = vxor.u32 %v888, 2147483648
    %v890 = vmul.f32 %v889, 1.442695
    %v891 = vpow.pop %v890
    %v892 = vadd.f32 %v891, 1.0
    %v893 = vrcp.pop %v892
    %v894 = vmul.f32 1.0, %v893
    %v895 = vtanh.pop %v888
    %v896 = vmul.f32 %v894, %v804
    %898 = vrot.lane.b32.xlu0 %v895, 64
    %v899 = vpop.permute.xlu0 %898
    %v901 = vmul.f32 %v894, %v899
    %903 = vrot.lane.b32.xlu0 %v901, 32
    %v904 = vpop.permute.xlu0 %903
    %v906 = vadd.f32 %v896, %v904
    %v907 = vtanh.pop %v906
    %909 = vrot.lane.b32.xlu0 %v907, 64
    %v910 = vpop.permute.xlu0 %909
    %v912 = vmul.f32 %v894, %v910
    %914 = vrot.lane.b32.xlu0 %v912, 32
    %v915 = vpop.permute.xlu0 %914
    %917 = vst.msk [vmem:[#allocation2 + $0x30] sm:$0xff] %vm202, %v915
    %v918 = vsel %vm202, %v915, 0
    %920 = vmatprep.subr.mxu0 0.0
    %921 = vmatpush1.msra.mxu0 0.0
    %922 = vmatprep.subr.mxu0 0.0
    %923 = vmatpush1.msra.mxu0 0.0
    %924 = vmatprep.subr.mxu0 0.0
    %925 = vmatpush1.msra.mxu0 0.0
    %926 = vmatprep.subr.mxu0 0.0
    %927 = vmatpush1.msra.mxu0 0.0
    %928 = vmatprep.subr.mxu0 0.0
    %929 = vmatpush1.msra.mxu0 0.0
    %930 = vmatprep.subr.mxu0 0.0
    %931 = vmatpush1.msra.mxu0 0.0
    %932 = vmatprep.subr.mxu0 0.0
    %933 = vmatpush1.msra.mxu0 0.0
    %934 = vmatprep.subr.mxu0 0.0
    %935 = vmatpush1.msra.mxu0 0.0
    %936 = vmatprep.subr.mxu0 0.0
    %937 = vmatpush1.msra.mxu0 0.0
    %938 = vmatprep.subr.mxu0 0.0
    %939 = vmatpush1.msra.mxu0 0.0
    %940 = vmatprep.subr.mxu0 0.0
    %941 = vmatpush1.msra.mxu0 0.0
    %942 = vmatprep.subr.mxu0 0.0
    %943 = vmatpush1.msra.mxu0 0.0
    %944 = vmatprep.subr.mxu0 0.0
    %945 = vmatpush1.msra.mxu0 %v64
    %946 = vmatprep.subr.mxu0 0.0
    %947 = vmatpush1.msra.mxu0 %v63
    %948 = vmatprep.subr.mxu0 0.0
    %949 = vmatpush1.msra.mxu0 %v62
    %950 = vmatprep.subr.mxu0 0.0
    %951 = vmatpush1.msra.mxu0 %v61
    %952 = vmatprep.subr.mxu0 0.0
    %953 = vmatpush2.msra.mxu0 0.0
    %954 = vmatprep.subr.mxu0 0.0
    %955 = vmatpush2.msra.mxu0 0.0
    %956 = vmatprep.subr.mxu0 0.0
    %957 = vmatpush2.msra.mxu0 0.0
    %958 = vmatprep.subr.mxu0 0.0
    %959 = vmatpush2.msra.mxu0 0.0
    %960 = vmatprep.subr.mxu0 0.0
    %961 = vmatpush2.msra.mxu0 0.0
    %962 = vmatprep.subr.mxu0 0.0
    %963 = vmatpush2.msra.mxu0 0.0
    %964 = vmatprep.subr.mxu0 0.0
    %965 = vmatpush2.msra.mxu0 0.0
    %966 = vmatprep.subr.mxu0 0.0
    %967 = vmatpush2.msra.mxu0 0.0
    %968 = vmatprep.subr.mxu0 0.0
    %969 = vmatpush2.msra.mxu0 0.0
    %970 = vmatprep.subr.mxu0 0.0
    %971 = vmatpush2.msra.mxu0 0.0
    %972 = vmatprep.subr.mxu0 0.0
    %973 = vmatpush2.msra.mxu0 0.0
    %974 = vmatprep.subr.mxu0 0.0
    %975 = vmatpush2.msra.mxu0 0.0
    %976 = vmatprep.subr.mxu0 0.0
    %977 = vmatpush2.msra.mxu0 0.0
    %978 = vmatprep.subr.mxu0 0.0
    %979 = vmatpush2.msra.mxu0 0.0
    %980 = vmatprep.subr.mxu0 0.0
    %981 = vmatpush2.msra.mxu0 0.0
    %982 = vmatprep.subr.mxu0 0.0
    %983 = vmatpush2.msra.mxu0 0.0
    %984 = vmatprep.mubr.f32.mxu0 0.0
    %985 = vmatmul.mubr.f32.gmra.mxu0 %v918
    %v986 = vpop.f32.mrf.mxu0
    %v987 = vadd.f32 0.0, %v986
    %v988 = vpop.f32.mrf.mxu0
    %989 = vdwg.mxu0
    %v990 = vadd.f32 %v199, %v987
    %v991 = vxor.u32 %v990, 2147483648
    %v992 = vmul.f32 %v991, 1.442695
    %v993 = vpow.pop %v992
    %v994 = vadd.f32 %v993, 1.0
    %v995 = vrcp.pop %v994
    %v996 = vmul.f32 1.0, %v995
    %v997 = vtanh.pop %v990
    %v998 = vmul.f32 %v996, %v906
    %1000 = vrot.lane.b32.xlu0 %v997, 64
    %v1001 = vpop.permute.xlu0 %1000
    %v1003 = vmul.f32 %v996, %v1001
    %1005 = vrot.lane.b32.xlu0 %v1003, 32
    %v1006 = vpop.permute.xlu0 %1005
    %v1008 = vadd.f32 %v998, %v1006
    %v1009 = vtanh.pop %v1008
    %1011 = vrot.lane.b32.xlu0 %v1009, 64
    %v1012 = vpop.permute.xlu0 %1011
    %v1014 = vmul.f32 %v996, %v1012
    %1016 = vrot.lane.b32.xlu0 %v1014, 32
    %v1017 = vpop.permute.xlu0 %1016
    %1019 = vst.msk [vmem:[#allocation2 + $0x38] sm:$0xff] %vm202, %v1017
    %v1020 = vld [vmem:[#allocation2] sm:$0xff]
    %v1021 = vld [vmem:[#allocation2 + $0x8] sm:$0xff]
    %v1022 = vld [vmem:[#allocation2 + $0x10] sm:$0xff]
    %v1023 = vld [vmem:[#allocation2 + $0x18] sm:$0xff]
    %v1024 = vld [vmem:[#allocation2 + $0x20] sm:$0xff]
    %v1025 = vld [vmem:[#allocation2 + $0x28] sm:$0xff]
    %v1026 = vld [vmem:[#allocation2 + $0x30] sm:$0xff]
    %v1027 = vld [vmem:[#allocation2 + $0x38] sm:$0xff]
    %v1028 = vld [vmem:[%s4] sm:$0xff]
    %v1029 = vld [vmem:[%s4 + $0x8] sm:$0xff]
    %v1030 = vld [vmem:[%s4 + $0x10] sm:$0xff]
    %v1031 = vld [vmem:[%s4 + $0x18] sm:$0xff]
    %v1032 = vld [vmem:[%s5] sm:$0xff]
    %v1033 = vld [vmem:[%s5 + $0x8] sm:$0xff]
    %v1034 = vld [vmem:[%s5 + $0x10] sm:$0xff]
    %v1035 = vld [vmem:[%s5 + $0x18] sm:$0xff]
    %v1036 = vld [vmem:[%s6] sm:$0x1]
    %v1038 = vlaneseq
    %v1039 = vshrl.u32 %v1038, 7
    %v1040 = vsub.s32 0, %v1039
    %v1041 = vrot.slane %v1036, %v1040
    %v1044 = vsel %vm202, %v1020, 0
    %v1047 = vsel %vm202, %v1021, 0
    %v1050 = vsel %vm202, %v1022, 0
    %v1053 = vsel %vm202, %v1023, 0
    %v1056 = vsel %vm202, %v1024, 0
    %v1059 = vsel %vm202, %v1025, 0
    %v1062 = vsel %vm202, %v1026, 0
    %v1065 = vsel %vm202, %v1027, 0
    %1067 = vmatprep.subr.mxu0 0.0
    %1068 = vmatpush1.msra.mxu0 0.0
    %1069 = vmatprep.subr.mxu0 0.0
    %1070 = vmatpush1.msra.mxu0 0.0
    %1071 = vmatprep.subr.mxu0 0.0
    %1072 = vmatpush1.msra.mxu0 0.0
    %1073 = vmatprep.subr.mxu0 0.0
    %1074 = vmatpush1.msra.mxu0 0.0
    %1075 = vmatprep.subr.mxu0 0.0
    %1076 = vmatpush1.msra.mxu0 0.0
    %1077 = vmatprep.subr.mxu0 0.0
    %1078 = vmatpush1.msra.mxu0 0.0
    %1079 = vmatprep.subr.mxu0 0.0
    %1080 = vmatpush1.msra.mxu0 0.0
    %1081 = vmatprep.subr.mxu0 0.0
    %1082 = vmatpush1.msra.mxu0 0.0
    %1083 = vmatprep.subr.mxu0 0.0
    %1084 = vmatpush1.msra.mxu0 0.0
    %1085 = vmatprep.subr.mxu0 0.0
    %1086 = vmatpush1.msra.mxu0 0.0
    %1087 = vmatprep.subr.mxu0 0.0
    %1088 = vmatpush1.msra.mxu0 0.0
    %1089 = vmatprep.subr.mxu0 0.0
    %1090 = vmatpush1.msra.mxu0 0.0
    %1091 = vmatprep.subr.mxu0 0.0
    %1092 = vmatpush1.msra.mxu0 %v1031
    %1093 = vmatprep.subr.mxu0 0.0
    %1094 = vmatpush1.msra.mxu0 %v1030
    %1095 = vmatprep.subr.mxu0 0.0
    %1096 = vmatpush1.msra.mxu0 %v1029
    %1097 = vmatprep.subr.mxu0 0.0
    %1098 = vmatpush1.msra.mxu0 %v1028
    %1099 = vmatprep.subr.mxu0 0.0
    %1100 = vmatpush2.msra.mxu0 0.0
    %1101 = vmatprep.subr.mxu0 0.0
    %1102 = vmatpush2.msra.mxu0 0.0
    %1103 = vmatprep.subr.mxu0 0.0
    %1104 = vmatpush2.msra.mxu0 0.0
    %1105 = vmatprep.subr.mxu0 0.0
    %1106 = vmatpush2.msra.mxu0 0.0
    %1107 = vmatprep.subr.mxu0 0.0
    %1108 = vmatpush2.msra.mxu0 0.0
    %1109 = vmatprep.subr.mxu0 0.0
    %1110 = vmatpush2.msra.mxu0 0.0
    %1111 = vmatprep.subr.mxu0 0.0
    %1112 = vmatpush2.msra.mxu0 0.0
    %1113 = vmatprep.subr.mxu0 0.0
    %1114 = vmatpush2.msra.mxu0 0.0
    %1115 = vmatprep.subr.mxu0 0.0
    %1116 = vmatpush2.msra.mxu0 0.0
    %1117 = vmatprep.subr.mxu0 0.0
    %1118 = vmatpush2.msra.mxu0 0.0
    %1119 = vmatprep.subr.mxu0 0.0
    %1120 = vmatpush2.msra.mxu0 0.0
    %1121 = vmatprep.subr.mxu0 0.0
    %1122 = vmatpush2.msra.mxu0 0.0
    %1123 = vmatprep.subr.mxu0 0.0
    %1124 = vmatpush2.msra.mxu0 0.0
    %1125 = vmatprep.subr.mxu0 0.0
    %1126 = vmatpush2.msra.mxu0 0.0
    %1127 = vmatprep.subr.mxu0 0.0
    %1128 = vmatpush2.msra.mxu0 0.0
    %1129 = vmatprep.subr.mxu0 0.0
    %1130 = vmatpush2.msra.mxu0 0.0
    %1131 = vmatprep.mubr.f32.mxu0 0.0
    %1132 = vmatmul.mubr.f32.gmra.mxu0 %v1044
    %v1133 = vpop.f32.mrf.mxu0
    %v1134 = vadd.f32 %v1041, %v1133
    %v1135 = vpop.f32.mrf.mxu0
    %1136 = vmatprep.mubr.f32.mxu0 0.0
    %1137 = vmatmul.mubr.f32.gmra.mxu0 %v1047
    %v1138 = vpop.f32.mrf.mxu0
    %v1139 = vadd.f32 %v1041, %v1138
    %v1140 = vpop.f32.mrf.mxu0
    %1141 = vmatprep.mubr.f32.mxu0 0.0
    %1142 = vmatmul.mubr.f32.gmra.mxu0 %v1050
    %v1143 = vpop.f32.mrf.mxu0
    %v1144 = vadd.f32 %v1041, %v1143
    %v1145 = vpop.f32.mrf.mxu0
    %1146 = vmatprep.mubr.f32.mxu0 0.0
    %1147 = vmatmul.mubr.f32.gmra.mxu0 %v1053
    %v1148 = vpop.f32.mrf.mxu0
    %v1149 = vadd.f32 %v1041, %v1148
    %v1150 = vpop.f32.mrf.mxu0
    %1151 = vmatprep.mubr.f32.mxu0 0.0
    %1152 = vmatmul.mubr.f32.gmra.mxu0 %v1056
    %v1153 = vpop.f32.mrf.mxu0
    %v1154 = vadd.f32 %v1041, %v1153
    %v1155 = vpop.f32.mrf.mxu0
    %1156 = vmatprep.mubr.f32.mxu0 0.0
    %1157 = vmatmul.mubr.f32.gmra.mxu0 %v1059
    %v1158 = vpop.f32.mrf.mxu0
    %v1159 = vadd.f32 %v1041, %v1158
    %v1160 = vpop.f32.mrf.mxu0
    %1161 = vmatprep.mubr.f32.mxu0 0.0
    %1162 = vmatmul.mubr.f32.gmra.mxu0 %v1062
    %v1163 = vpop.f32.mrf.mxu0
    %v1164 = vadd.f32 %v1041, %v1163
    %v1165 = vpop.f32.mrf.mxu0
    %1166 = vmatprep.mubr.f32.mxu0 0.0
    %1167 = vmatmul.mubr.f32.gmra.mxu0 %v1065
    %v1168 = vpop.f32.mrf.mxu0
    %v1169 = vadd.f32 %v1041, %v1168
    %v1170 = vpop.f32.mrf.mxu0
    %1171 = vdwg.mxu0
    %1172 = vmatprep.subr.mxu0 0.0
    %1173 = vmatpush1.msra.mxu0 0.0
    %1174 = vmatprep.subr.mxu0 0.0
    %1175 = vmatpush1.msra.mxu0 0.0
    %1176 = vmatprep.subr.mxu0 0.0
    %1177 = vmatpush1.msra.mxu0 0.0
    %1178 = vmatprep.subr.mxu0 0.0
    %1179 = vmatpush1.msra.mxu0 0.0
    %1180 = vmatprep.subr.mxu0 0.0
    %1181 = vmatpush1.msra.mxu0 0.0
    %1182 = vmatprep.subr.mxu0 0.0
    %1183 = vmatpush1.msra.mxu0 0.0
    %1184 = vmatprep.subr.mxu0 0.0
    %1185 = vmatpush1.msra.mxu0 0.0
    %1186 = vmatprep.subr.mxu0 0.0
    %1187 = vmatpush1.msra.mxu0 0.0
    %1188 = vmatprep.subr.mxu0 0.0
    %1189 = vmatpush1.msra.mxu0 0.0
    %1190 = vmatprep.subr.mxu0 0.0
    %1191 = vmatpush1.msra.mxu0 0.0
    %1192 = vmatprep.subr.mxu0 0.0
    %1193 = vmatpush1.msra.mxu0 0.0
    %1194 = vmatprep.subr.mxu0 0.0
    %1195 = vmatpush1.msra.mxu0 0.0
    %1196 = vmatprep.subr.mxu0 0.0
    %1197 = vmatpush1.msra.mxu0 %v1035
    %1198 = vmatprep.subr.mxu0 0.0
    %1199 = vmatpush1.msra.mxu0 %v1034
    %1200 = vmatprep.subr.mxu0 0.0
    %1201 = vmatpush1.msra.mxu0 %v1033
    %1202 = vmatprep.subr.mxu0 0.0
    %1203 = vmatpush1.msra.mxu0 %v1032
    %1204 = vmatprep.subr.mxu0 0.0
    %1205 = vmatpush2.msra.mxu0 0.0
    %1206 = vmatprep.subr.mxu0 0.0
    %1207 = vmatpush2.msra.mxu0 0.0
    %1208 = vmatprep.subr.mxu0 0.0
    %1209 = vmatpush2.msra.mxu0 0.0
    %1210 = vmatprep.subr.mxu0 0.0
    %1211 = vmatpush2.msra.mxu0 0.0
    %1212 = vmatprep.subr.mxu0 0.0
    %1213 = vmatpush2.msra.mxu0 0.0
    %1214 = vmatprep.subr.mxu0 0.0
    %1215 = vmatpush2.msra.mxu0 0.0
    %1216 = vmatprep.subr.mxu0 0.0
    %1217 = vmatpush2.msra.mxu0 0.0
    %1218 = vmatprep.subr.mxu0 0.0
    %1219 = vmatpush2.msra.mxu0 0.0
    %1220 = vmatprep.subr.mxu0 0.0
    %1221 = vmatpush2.msra.mxu0 0.0
    %1222 = vmatprep.subr.mxu0 0.0
    %1223 = vmatpush2.msra.mxu0 0.0
    %1224 = vmatprep.subr.mxu0 0.0
    %1225 = vmatpush2.msra.mxu0 0.0
    %1226 = vmatprep.subr.mxu0 0.0
    %1227 = vmatpush2.msra.mxu0 0.0
    %1228 = vmatprep.subr.mxu0 0.0
    %1229 = vmatpush2.msra.mxu0 0.0
    %1230 = vmatprep.subr.mxu0 0.0
    %1231 = vmatpush2.msra.mxu0 0.0
    %1232 = vmatprep.subr.mxu0 0.0
    %1233 = vmatpush2.msra.mxu0 0.0
    %1234 = vmatprep.subr.mxu0 0.0
    %1235 = vmatpush2.msra.mxu0 0.0
    %1236 = vmatprep.mubr.f32.mxu0 0.0
    %1237 = vmatmul.mubr.f32.gmra.mxu0 %v204
    %v1238 = vpop.f32.mrf.mxu0
    %v1239 = vadd.f32 0.0, %v1238
    %v1240 = vpop.f32.mrf.mxu0
    %1241 = vdwg.mxu0
    %v1242 = vadd.f32 %v1134, %v1239
    %v1243 = vxor.u32 %v1242, 2147483648
    %v1244 = vmul.f32 %v1243, 1.442695
    %v1245 = vpow.pop %v1244
    %v1246 = vadd.f32 %v1245, 1.0
    %v1247 = vrcp.pop %v1246
    %v1248 = vmul.f32 1.0, %v1247
    %v1249 = vtanh.pop %v1242
    %v1250 = vmul.f32 %v1248, 0.0
    %1252 = vrot.lane.b32.xlu0 %v1249, 64
    %v1253 = vpop.permute.xlu0 %1252
    %v1255 = vmul.f32 %v1248, %v1253
    %1257 = vrot.lane.b32.xlu0 %v1255, 32
    %v1258 = vpop.permute.xlu0 %1257
    %v1260 = vadd.f32 %v1250, %v1258
    %v1261 = vtanh.pop %v1260
    %1263 = vrot.lane.b32.xlu0 %v1261, 64
    %v1264 = vpop.permute.xlu0 %1263
    %v1266 = vmul.f32 %v1248, %v1264
    %1268 = vrot.lane.b32.xlu0 %v1266, 32
    %v1269 = vpop.permute.xlu0 %1268
    %1271 = vst.msk [vmem:[#allocation2] sm:$0xff] %vm202, %v1269
    %v1272 = vsel %vm202, %v1269, 0
    %1274 = vmatprep.subr.mxu0 0.0
    %1275 = vmatpush1.msra.mxu0 0.0
    %1276 = vmatprep.subr.mxu0 0.0
    %1277 = vmatpush1.msra.mxu0 0.0
    %1278 = vmatprep.subr.mxu0 0.0
    %1279 = vmatpush1.msra.mxu0 0.0
    %1280 = vmatprep.subr.mxu0 0.0
    %1281 = vmatpush1.msra.mxu0 0.0
    %1282 = vmatprep.subr.mxu0 0.0
    %1283 = vmatpush1.msra.mxu0 0.0
    %1284 = vmatprep.subr.mxu0 0.0
    %1285 = vmatpush1.msra.mxu0 0.0
    %1286 = vmatprep.subr.mxu0 0.0
    %1287 = vmatpush1.msra.mxu0 0.0
    %1288 = vmatprep.subr.mxu0 0.0
    %1289 = vmatpush1.msra.mxu0 0.0
    %1290 = vmatprep.subr.mxu0 0.0
    %1291 = vmatpush1.msra.mxu0 0.0
    %1292 = vmatprep.subr.mxu0 0.0
    %1293 = vmatpush1.msra.mxu0 0.0
    %1294 = vmatprep.subr.mxu0 0.0
    %1295 = vmatpush1.msra.mxu0 0.0
    %1296 = vmatprep.subr.mxu0 0.0
    %1297 = vmatpush1.msra.mxu0 0.0
    %1298 = vmatprep.subr.mxu0 0.0
    %1299 = vmatpush1.msra.mxu0 %v1035
    %1300 = vmatprep.subr.mxu0 0.0
    %1301 = vmatpush1.msra.mxu0 %v1034
    %1302 = vmatprep.subr.mxu0 0.0
    %1303 = vmatpush1.msra.mxu0 %v1033
    %1304 = vmatprep.subr.mxu0 0.0
    %1305 = vmatpush1.msra.mxu0 %v1032
    %1306 = vmatprep.subr.mxu0 0.0
    %1307 = vmatpush2.msra.mxu0 0.0
    %1308 = vmatprep.subr.mxu0 0.0
    %1309 = vmatpush2.msra.mxu0 0.0
    %1310 = vmatprep.subr.mxu0 0.0
    %1311 = vmatpush2.msra.mxu0 0.0
    %1312 = vmatprep.subr.mxu0 0.0
    %1313 = vmatpush2.msra.mxu0 0.0
    %1314 = vmatprep.subr.mxu0 0.0
    %1315 = vmatpush2.msra.mxu0 0.0
    %1316 = vmatprep.subr.mxu0 0.0
    %1317 = vmatpush2.msra.mxu0 0.0
    %1318 = vmatprep.subr.mxu0 0.0
    %1319 = vmatpush2.msra.mxu0 0.0
    %1320 = vmatprep.subr.mxu0 0.0
    %1321 = vmatpush2.msra.mxu0 0.0
    %1322 = vmatprep.subr.mxu0 0.0
    %1323 = vmatpush2.msra.mxu0 0.0
    %1324 = vmatprep.subr.mxu0 0.0
    %1325 = vmatpush2.msra.mxu0 0.0
    %1326 = vmatprep.subr.mxu0 0.0
    %1327 = vmatpush2.msra.mxu0 0.0
    %1328 = vmatprep.subr.mxu0 0.0
    %1329 = vmatpush2.msra.mxu0 0.0
    %1330 = vmatprep.subr.mxu0 0.0
    %1331 = vmatpush2.msra.mxu0 0.0
    %1332 = vmatprep.subr.mxu0 0.0
    %1333 = vmatpush2.msra.mxu0 0.0
    %1334 = vmatprep.subr.mxu0 0.0
    %1335 = vmatpush2.msra.mxu0 0.0
    %1336 = vmatprep.subr.mxu0 0.0
    %1337 = vmatpush2.msra.mxu0 0.0
    %1338 = vmatprep.mubr.f32.mxu0 0.0
    %1339 = vmatmul.mubr.f32.gmra.mxu0 %v1272
    %v1340 = vpop.f32.mrf.mxu0
    %v1341 = vadd.f32 0.0, %v1340
    %v1342 = vpop.f32.mrf.mxu0
    %1343 = vdwg.mxu0
    %v1344 = vadd.f32 %v1139, %v1341
    %v1345 = vxor.u32 %v1344, 2147483648
    %v1346 = vmul.f32 %v1345, 1.442695
    %v1347 = vpow.pop %v1346
    %v1348 = vadd.f32 %v1347, 1.0
    %v1349 = vrcp.pop %v1348
    %v1350 = vmul.f32 1.0, %v1349
    %v1351 = vtanh.pop %v1344
    %v1352 = vmul.f32 %v1350, %v1260
    %1354 = vrot.lane.b32.xlu0 %v1351, 64
    %v1355 = vpop.permute.xlu0 %1354
    %v1357 = vmul.f32 %v1350, %v1355
    %1359 = vrot.lane.b32.xlu0 %v1357, 32
    %v1360 = vpop.permute.xlu0 %1359
    %v1362 = vadd.f32 %v1352, %v1360
    %v1363 = vtanh.pop %v1362
    %1365 = vrot.lane.b32.xlu0 %v1363, 64
    %v1366 = vpop.permute.xlu0 %1365
    %v1368 = vmul.f32 %v1350, %v1366
    %1370 = vrot.lane.b32.xlu0 %v1368, 32
    %v1371 = vpop.permute.xlu0 %1370
    %1373 = vst.msk [vmem:[#allocation2 + $0x8] sm:$0xff] %vm202, %v1371
    %v1374 = vsel %vm202, %v1371, 0
    %1376 = vmatprep.subr.mxu0 0.0
    %1377 = vmatpush1.msra.mxu0 0.0
    %1378 = vmatprep.subr.mxu0 0.0
    %1379 = vmatpush1.msra.mxu0 0.0
    %1380 = vmatprep.subr.mxu0 0.0
    %1381 = vmatpush1.msra.mxu0 0.0
    %1382 = vmatprep.subr.mxu0 0.0
    %1383 = vmatpush1.msra.mxu0 0.0
    %1384 = vmatprep.subr.mxu0 0.0
    %1385 = vmatpush1.msra.mxu0 0.0
    %1386 = vmatprep.subr.mxu0 0.0
    %1387 = vmatpush1.msra.mxu0 0.0
    %1388 = vmatprep.subr.mxu0 0.0
    %1389 = vmatpush1.msra.mxu0 0.0
    %1390 = vmatprep.subr.mxu0 0.0
    %1391 = vmatpush1.msra.mxu0 0.0
    %1392 = vmatprep.subr.mxu0 0.0
    %1393 = vmatpush1.msra.mxu0 0.0
    %1394 = vmatprep.subr.mxu0 0.0
    %1395 = vmatpush1.msra.mxu0 0.0
    %1396 = vmatprep.subr.mxu0 0.0
    %1397 = vmatpush1.msra.mxu0 0.0
    %1398 = vmatprep.subr.mxu0 0.0
    %1399 = vmatpush1.msra.mxu0 0.0
    %1400 = vmatprep.subr.mxu0 0.0
    %1401 = vmatpush1.msra.mxu0 %v1035
    %1402 = vmatprep.subr.mxu0 0.0
    %1403 = vmatpush1.msra.mxu0 %v1034
    %1404 = vmatprep.subr.mxu0 0.0
    %1405 = vmatpush1.msra.mxu0 %v1033
    %1406 = vmatprep.subr.mxu0 0.0
    %1407 = vmatpush1.msra.mxu0 %v1032
    %1408 = vmatprep.subr.mxu0 0.0
    %1409 = vmatpush2.msra.mxu0 0.0
    %1410 = vmatprep.subr.mxu0 0.0
    %1411 = vmatpush2.msra.mxu0 0.0
    %1412 = vmatprep.subr.mxu0 0.0
    %1413 = vmatpush2.msra.mxu0 0.0
    %1414 = vmatprep.subr.mxu0 0.0
    %1415 = vmatpush2.msra.mxu0 0.0
    %1416 = vmatprep.subr.mxu0 0.0
    %1417 = vmatpush2.msra.mxu0 0.0
    %1418 = vmatprep.subr.mxu0 0.0
    %1419 = vmatpush2.msra.mxu0 0.0
    %1420 = vmatprep.subr.mxu0 0.0
    %1421 = vmatpush2.msra.mxu0 0.0
    %1422 = vmatprep.subr.mxu0 0.0
    %1423 = vmatpush2.msra.mxu0 0.0
    %1424 = vmatprep.subr.mxu0 0.0
    %1425 = vmatpush2.msra.mxu0 0.0
    %1426 = vmatprep.subr.mxu0 0.0
    %1427 = vmatpush2.msra.mxu0 0.0
    %1428 = vmatprep.subr.mxu0 0.0
    %1429 = vmatpush2.msra.mxu0 0.0
    %1430 = vmatprep.subr.mxu0 0.0
    %1431 = vmatpush2.msra.mxu0 0.0
    %1432 = vmatprep.subr.mxu0 0.0
    %1433 = vmatpush2.msra.mxu0 0.0
    %1434 = vmatprep.subr.mxu0 0.0
    %1435 = vmatpush2.msra.mxu0 0.0
    %1436 = vmatprep.subr.mxu0 0.0
    %1437 = vmatpush2.msra.mxu0 0.0
    %1438 = vmatprep.subr.mxu0 0.0
    %1439 = vmatpush2.msra.mxu0 0.0
    %1440 = vmatprep.mubr.f32.mxu0 0.0
    %1441 = vmatmul.mubr.f32.gmra.mxu0 %v1374
    %v1442 = vpop.f32.mrf.mxu0
    %v1443 = vadd.f32 0.0, %v1442
    %v1444 = vpop.f32.mrf.mxu0
    %1445 = vdwg.mxu0
    %v1446 = vadd.f32 %v1144, %v1443
    %v1447 = vxor.u32 %v1446, 2147483648
    %v1448 = vmul.f32 %v1447, 1.442695
    %v1449 = vpow.pop %v1448
    %v1450 = vadd.f32 %v1449, 1.0
    %v1451 = vrcp.pop %v1450
    %v1452 = vmul.f32 1.0, %v1451
    %v1453 = vtanh.pop %v1446
    %v1454 = vmul.f32 %v1452, %v1362
    %1456 = vrot.lane.b32.xlu0 %v1453, 64
    %v1457 = vpop.permute.xlu0 %1456
    %v1459 = vmul.f32 %v1452, %v1457
    %1461 = vrot.lane.b32.xlu0 %v1459, 32
    %v1462 = vpop.permute.xlu0 %1461
    %v1464 = vadd.f32 %v1454, %v1462
    %v1465 = vtanh.pop %v1464
    %1467 = vrot.lane.b32.xlu0 %v1465, 64
    %v1468 = vpop.permute.xlu0 %1467
    %v1470 = vmul.f32 %v1452, %v1468
    %1472 = vrot.lane.b32.xlu0 %v1470, 32
    %v1473 = vpop.permute.xlu0 %1472
    %1475 = vst.msk [vmem:[#allocation2 + $0x10] sm:$0xff] %vm202, %v1473
    %v1476 = vsel %vm202, %v1473, 0
    %1478 = vmatprep.subr.mxu0 0.0
    %1479 = vmatpush1.msra.mxu0 0.0
    %1480 = vmatprep.subr.mxu0 0.0
    %1481 = vmatpush1.msra.mxu0 0.0
    %1482 = vmatprep.subr.mxu0 0.0
    %1483 = vmatpush1.msra.mxu0 0.0
    %1484 = vmatprep.subr.mxu0 0.0
    %1485 = vmatpush1.msra.mxu0 0.0
    %1486 = vmatprep.subr.mxu0 0.0
    %1487 = vmatpush1.msra.mxu0 0.0
    %1488 = vmatprep.subr.mxu0 0.0
    %1489 = vmatpush1.msra.mxu0 0.0
    %1490 = vmatprep.subr.mxu0 0.0
    %1491 = vmatpush1.msra.mxu0 0.0
    %1492 = vmatprep.subr.mxu0 0.0
    %1493 = vmatpush1.msra.mxu0 0.0
    %1494 = vmatprep.subr.mxu0 0.0
    %1495 = vmatpush1.msra.mxu0 0.0
    %1496 = vmatprep.subr.mxu0 0.0
    %1497 = vmatpush1.msra.mxu0 0.0
    %1498 = vmatprep.subr.mxu0 0.0
    %1499 = vmatpush1.msra.mxu0 0.0
    %1500 = vmatprep.subr.mxu0 0.0
    %1501 = vmatpush1.msra.mxu0 0.0
    %1502 = vmatprep.subr.mxu0 0.0
    %1503 = vmatpush1.msra.mxu0 %v1035
    %1504 = vmatprep.subr.mxu0 0.0
    %1505 = vmatpush1.msra.mxu0 %v1034
    %1506 = vmatprep.subr.mxu0 0.0
    %1507 = vmatpush1.msra.mxu0 %v1033
    %1508 = vmatprep.subr.mxu0 0.0
    %1509 = vmatpush1.msra.mxu0 %v1032
    %1510 = vmatprep.subr.mxu0 0.0
    %1511 = vmatpush2.msra.mxu0 0.0
    %1512 = vmatprep.subr.mxu0 0.0
    %1513 = vmatpush2.msra.mxu0 0.0
    %1514 = vmatprep.subr.mxu0 0.0
    %1515 = vmatpush2.msra.mxu0 0.0
    %1516 = vmatprep.subr.mxu0 0.0
    %1517 = vmatpush2.msra.mxu0 0.0
    %1518 = vmatprep.subr.mxu0 0.0
    %1519 = vmatpush2.msra.mxu0 0.0
    %1520 = vmatprep.subr.mxu0 0.0
    %1521 = vmatpush2.msra.mxu0 0.0
    %1522 = vmatprep.subr.mxu0 0.0
    %1523 = vmatpush2.msra.mxu0 0.0
    %1524 = vmatprep.subr.mxu0 0.0
    %1525 = vmatpush2.msra.mxu0 0.0
    %1526 = vmatprep.subr.mxu0 0.0
    %1527 = vmatpush2.msra.mxu0 0.0
    %1528 = vmatprep.subr.mxu0 0.0
    %1529 = vmatpush2.msra.mxu0 0.0
    %1530 = vmatprep.subr.mxu0 0.0
    %1531 = vmatpush2.msra.mxu0 0.0
    %1532 = vmatprep.subr.mxu0 0.0
    %1533 = vmatpush2.msra.mxu0 0.0
    %1534 = vmatprep.subr.mxu0 0.0
    %1535 = vmatpush2.msra.mxu0 0.0
    %1536 = vmatprep.subr.mxu0 0.0
    %1537 = vmatpush2.msra.mxu0 0.0
    %1538 = vmatprep.subr.mxu0 0.0
    %1539 = vmatpush2.msra.mxu0 0.0
    %1540 = vmatprep.subr.mxu0 0.0
    %1541 = vmatpush2.msra.mxu0 0.0
    %1542 = vmatprep.mubr.f32.mxu0 0.0
    %1543 = vmatmul.mubr.f32.gmra.mxu0 %v1476
    %v1544 = vpop.f32.mrf.mxu0
    %v1545 = vadd.f32 0.0, %v1544
    %v1546 = vpop.f32.mrf.mxu0
    %1547 = vdwg.mxu0
    %v1548 = vadd.f32 %v1149, %v1545
    %v1549 = vxor.u32 %v1548, 2147483648
    %v1550 = vmul.f32 %v1549, 1.442695
    %v1551 = vpow.pop %v1550
    %v1552 = vadd.f32 %v1551, 1.0
    %v1553 = vrcp.pop %v1552
    %v1554 = vmul.f32 1.0, %v1553
    %v1555 = vtanh.pop %v1548
    %v1556 = vmul.f32 %v1554, %v1464
    %1558 = vrot.lane.b32.xlu0 %v1555, 64
    %v1559 = vpop.permute.xlu0 %1558
    %v1561 = vmul.f32 %v1554, %v1559
    %1563 = vrot.lane.b32.xlu0 %v1561, 32
    %v1564 = vpop.permute.xlu0 %1563
    %v1566 = vadd.f32 %v1556, %v1564
    %v1567 = vtanh.pop %v1566
    %1569 = vrot.lane.b32.xlu0 %v1567, 64
    %v1570 = vpop.permute.xlu0 %1569
    %v1572 = vmul.f32 %v1554, %v1570
    %1574 = vrot.lane.b32.xlu0 %v1572, 32
    %v1575 = vpop.permute.xlu0 %1574
    %1577 = vst.msk [vmem:[#allocation2 + $0x18] sm:$0xff] %vm202, %v1575
    %v1578 = vsel %vm202, %v1575, 0
    %1580 = vmatprep.subr.mxu0 0.0
    %1581 = vmatpush1.msra.mxu0 0.0
    %1582 = vmatprep.subr.mxu0 0.0
    %1583 = vmatpush1.msra.mxu0 0.0
    %1584 = vmatprep.subr.mxu0 0.0
    %1585 = vmatpush1.msra.mxu0 0.0
    %1586 = vmatprep.subr.mxu0 0.0
    %1587 = vmatpush1.msra.mxu0 0.0
    %1588 = vmatprep.subr.mxu0 0.0
    %1589 = vmatpush1.msra.mxu0 0.0
    %1590 = vmatprep.subr.mxu0 0.0
    %1591 = vmatpush1.msra.mxu0 0.0
    %1592 = vmatprep.subr.mxu0 0.0
    %1593 = vmatpush1.msra.mxu0 0.0
    %1594 = vmatprep.subr.mxu0 0.0
    %1595 = vmatpush1.msra.mxu0 0.0
    %1596 = vmatprep.subr.mxu0 0.0
    %1597 = vmatpush1.msra.mxu0 0.0
    %1598 = vmatprep.subr.mxu0 0.0
    %1599 = vmatpush1.msra.mxu0 0.0
    %1600 = vmatprep.subr.mxu0 0.0
    %1601 = vmatpush1.msra.mxu0 0.0
    %1602 = vmatprep.subr.mxu0 0.0
    %1603 = vmatpush1.msra.mxu0 0.0
    %1604 = vmatprep.subr.mxu0 0.0
    %1605 = vmatpush1.msra.mxu0 %v1035
    %1606 = vmatprep.subr.mxu0 0.0
    %1607 = vmatpush1.msra.mxu0 %v1034
    %1608 = vmatprep.subr.mxu0 0.0
    %1609 = vmatpush1.msra.mxu0 %v1033
    %1610 = vmatprep.subr.mxu0 0.0
    %1611 = vmatpush1.msra.mxu0 %v1032
    %1612 = vmatprep.subr.mxu0 0.0
    %1613 = vmatpush2.msra.mxu0 0.0
    %1614 = vmatprep.subr.mxu0 0.0
    %1615 = vmatpush2.msra.mxu0 0.0
    %1616 = vmatprep.subr.mxu0 0.0
    %1617 = vmatpush2.msra.mxu0 0.0
    %1618 = vmatprep.subr.mxu0 0.0
    %1619 = vmatpush2.msra.mxu0 0.0
    %1620 = vmatprep.subr.mxu0 0.0
    %1621 = vmatpush2.msra.mxu0 0.0
    %1622 = vmatprep.subr.mxu0 0.0
    %1623 = vmatpush2.msra.mxu0 0.0
    %1624 = vmatprep.subr.mxu0 0.0
    %1625 = vmatpush2.msra.mxu0 0.0
    %1626 = vmatprep.subr.mxu0 0.0
    %1627 = vmatpush2.msra.mxu0 0.0
    %1628 = vmatprep.subr.mxu0 0.0
    %1629 = vmatpush2.msra.mxu0 0.0
    %1630 = vmatprep.subr.mxu0 0.0
    %1631 = vmatpush2.msra.mxu0 0.0
    %1632 = vmatprep.subr.mxu0 0.0
    %1633 = vmatpush2.msra.mxu0 0.0
    %1634 = vmatprep.subr.mxu0 0.0
    %1635 = vmatpush2.msra.mxu0 0.0
    %1636 = vmatprep.subr.mxu0 0.0
    %1637 = vmatpush2.msra.mxu0 0.0
    %1638 = vmatprep.subr.mxu0 0.0
    %1639 = vmatpush2.msra.mxu0 0.0
    %1640 = vmatprep.subr.mxu0 0.0
    %1641 = vmatpush2.msra.mxu0 0.0
    %1642 = vmatprep.subr.mxu0 0.0
    %1643 = vmatpush2.msra.mxu0 0.0
    %1644 = vmatprep.mubr.f32.mxu0 0.0
    %1645 = vmatmul.mubr.f32.gmra.mxu0 %v1578
    %v1646 = vpop.f32.mrf.mxu0
    %v1647 = vadd.f32 0.0, %v1646
    %v1648 = vpop.f32.mrf.mxu0
    %1649 = vdwg.mxu0
    %v1650 = vadd.f32 %v1154, %v1647
    %v1651 = vxor.u32 %v1650, 2147483648
    %v1652 = vmul.f32 %v1651, 1.442695
    %v1653 = vpow.pop %v1652
    %v1654 = vadd.f32 %v1653, 1.0
    %v1655 = vrcp.pop %v1654
    %v1656 = vmul.f32 1.0, %v1655
    %v1657 = vtanh.pop %v1650
    %v1658 = vmul.f32 %v1656, %v1566
    %1660 = vrot.lane.b32.xlu0 %v1657, 64
    %v1661 = vpop.permute.xlu0 %1660
    %v1663 = vmul.f32 %v1656, %v1661
    %1665 = vrot.lane.b32.xlu0 %v1663, 32
    %v1666 = vpop.permute.xlu0 %1665
    %v1668 = vadd.f32 %v1658, %v1666
    %v1669 = vtanh.pop %v1668
    %1671 = vrot.lane.b32.xlu0 %v1669, 64
    %v1672 = vpop.permute.xlu0 %1671
    %v1674 = vmul.f32 %v1656, %v1672
    %1676 = vrot.lane.b32.xlu0 %v1674, 32
    %v1677 = vpop.permute.xlu0 %1676
    %1679 = vst.msk [vmem:[#allocation2 + $0x20] sm:$0xff] %vm202, %v1677
    %v1680 = vsel %vm202, %v1677, 0
    %1682 = vmatprep.subr.mxu0 0.0
    %1683 = vmatpush1.msra.mxu0 0.0
    %1684 = vmatprep.subr.mxu0 0.0
    %1685 = vmatpush1.msra.mxu0 0.0
    %1686 = vmatprep.subr.mxu0 0.0
    %1687 = vmatpush1.msra.mxu0 0.0
    %1688 = vmatprep.subr.mxu0 0.0
    %1689 = vmatpush1.msra.mxu0 0.0
    %1690 = vmatprep.subr.mxu0 0.0
    %1691 = vmatpush1.msra.mxu0 0.0
    %1692 = vmatprep.subr.mxu0 0.0
    %1693 = vmatpush1.msra.mxu0 0.0
    %1694 = vmatprep.subr.mxu0 0.0
    %1695 = vmatpush1.msra.mxu0 0.0
    %1696 = vmatprep.subr.mxu0 0.0
    %1697 = vmatpush1.msra.mxu0 0.0
    %1698 = vmatprep.subr.mxu0 0.0
    %1699 = vmatpush1.msra.mxu0 0.0
    %1700 = vmatprep.subr.mxu0 0.0
    %1701 = vmatpush1.msra.mxu0 0.0
    %1702 = vmatprep.subr.mxu0 0.0
    %1703 = vmatpush1.msra.mxu0 0.0
    %1704 = vmatprep.subr.mxu0 0.0
    %1705 = vmatpush1.msra.mxu0 0.0
    %1706 = vmatprep.subr.mxu0 0.0
    %1707 = vmatpush1.msra.mxu0 %v1035
    %1708 = vmatprep.subr.mxu0 0.0
    %1709 = vmatpush1.msra.mxu0 %v1034
    %1710 = vmatprep.subr.mxu0 0.0
    %1711 = vmatpush1.msra.mxu0 %v1033
    %1712 = vmatprep.subr.mxu0 0.0
    %1713 = vmatpush1.msra.mxu0 %v1032
    %1714 = vmatprep.subr.mxu0 0.0
    %1715 = vmatpush2.msra.mxu0 0.0
    %1716 = vmatprep.subr.mxu0 0.0
    %1717 = vmatpush2.msra.mxu0 0.0
    %1718 = vmatprep.subr.mxu0 0.0
    %1719 = vmatpush2.msra.mxu0 0.0
    %1720 = vmatprep.subr.mxu0 0.0
    %1721 = vmatpush2.msra.mxu0 0.0
    %1722 = vmatprep.subr.mxu0 0.0
    %1723 = vmatpush2.msra.mxu0 0.0
    %1724 = vmatprep.subr.mxu0 0.0
    %1725 = vmatpush2.msra.mxu0 0.0
    %1726 = vmatprep.subr.mxu0 0.0
    %1727 = vmatpush2.msra.mxu0 0.0
    %1728 = vmatprep.subr.mxu0 0.0
    %1729 = vmatpush2.msra.mxu0 0.0
    %1730 = vmatprep.subr.mxu0 0.0
    %1731 = vmatpush2.msra.mxu0 0.0
    %1732 = vmatprep.subr.mxu0 0.0
    %1733 = vmatpush2.msra.mxu0 0.0
    %1734 = vmatprep.subr.mxu0 0.0
    %1735 = vmatpush2.msra.mxu0 0.0
    %1736 = vmatprep.subr.mxu0 0.0
    %1737 = vmatpush2.msra.mxu0 0.0
    %1738 = vmatprep.subr.mxu0 0.0
    %1739 = vmatpush2.msra.mxu0 0.0
    %1740 = vmatprep.subr.mxu0 0.0
    %1741 = vmatpush2.msra.mxu0 0.0
    %1742 = vmatprep.subr.mxu0 0.0
    %1743 = vmatpush2.msra.mxu0 0.0
    %1744 = vmatprep.subr.mxu0 0.0
    %1745 = vmatpush2.msra.mxu0 0.0
    %1746 = vmatprep.mubr.f32.mxu0 0.0
    %1747 = vmatmul.mubr.f32.gmra.mxu0 %v1680
    %v1748 = vpop.f32.mrf.mxu0
    %v1749 = vadd.f32 0.0, %v1748
    %v1750 = vpop.f32.mrf.mxu0
    %1751 = vdwg.mxu0
    %v1752 = vadd.f32 %v1159, %v1749
    %v1753 = vxor.u32 %v1752, 2147483648
    %v1754 = vmul.f32 %v1753, 1.442695
    %v1755 = vpow.pop %v1754
    %v1756 = vadd.f32 %v1755, 1.0
    %v1757 = vrcp.pop %v1756
    %v1758 = vmul.f32 1.0, %v1757
    %v1759 = vtanh.pop %v1752
    %v1760 = vmul.f32 %v1758, %v1668
    %1762 = vrot.lane.b32.xlu0 %v1759, 64
    %v1763 = vpop.permute.xlu0 %1762
    %v1765 = vmul.f32 %v1758, %v1763
    %1767 = vrot.lane.b32.xlu0 %v1765, 32
    %v1768 = vpop.permute.xlu0 %1767
    %v1770 = vadd.f32 %v1760, %v1768
    %v1771 = vtanh.pop %v1770
    %1773 = vrot.lane.b32.xlu0 %v1771, 64
    %v1774 = vpop.permute.xlu0 %1773
    %v1776 = vmul.f32 %v1758, %v1774
    %1778 = vrot.lane.b32.xlu0 %v1776, 32
    %v1779 = vpop.permute.xlu0 %1778
    %1781 = vst.msk [vmem:[#allocation2 + $0x28] sm:$0xff] %vm202, %v1779
    %v1782 = vsel %vm202, %v1779, 0
    %1784 = vmatprep.subr.mxu0 0.0
    %1785 = vmatpush1.msra.mxu0 0.0
    %1786 = vmatprep.subr.mxu0 0.0
    %1787 = vmatpush1.msra.mxu0 0.0
    %1788 = vmatprep.subr.mxu0 0.0
    %1789 = vmatpush1.msra.mxu0 0.0
    %1790 = vmatprep.subr.mxu0 0.0
    %1791 = vmatpush1.msra.mxu0 0.0
    %1792 = vmatprep.subr.mxu0 0.0
    %1793 = vmatpush1.msra.mxu0 0.0
    %1794 = vmatprep.subr.mxu0 0.0
    %1795 = vmatpush1.msra.mxu0 0.0
    %1796 = vmatprep.subr.mxu0 0.0
    %1797 = vmatpush1.msra.mxu0 0.0
    %1798 = vmatprep.subr.mxu0 0.0
    %1799 = vmatpush1.msra.mxu0 0.0
    %1800 = vmatprep.subr.mxu0 0.0
    %1801 = vmatpush1.msra.mxu0 0.0
    %1802 = vmatprep.subr.mxu0 0.0
    %1803 = vmatpush1.msra.mxu0 0.0
    %1804 = vmatprep.subr.mxu0 0.0
    %1805 = vmatpush1.msra.mxu0 0.0
    %1806 = vmatprep.subr.mxu0 0.0
    %1807 = vmatpush1.msra.mxu0 0.0
    %1808 = vmatprep.subr.mxu0 0.0
    %1809 = vmatpush1.msra.mxu0 %v1035
    %1810 = vmatprep.subr.mxu0 0.0
    %1811 = vmatpush1.msra.mxu0 %v1034
    %1812 = vmatprep.subr.mxu0 0.0
    %1813 = vmatpush1.msra.mxu0 %v1033
    %1814 = vmatprep.subr.mxu0 0.0
    %1815 = vmatpush1.msra.mxu0 %v1032
    %1816 = vmatprep.subr.mxu0 0.0
    %1817 = vmatpush2.msra.mxu0 0.0
    %1818 = vmatprep.subr.mxu0 0.0
    %1819 = vmatpush2.msra.mxu0 0.0
    %1820 = vmatprep.subr.mxu0 0.0
    %1821 = vmatpush2.msra.mxu0 0.0
    %1822 = vmatprep.subr.mxu0 0.0
    %1823 = vmatpush2.msra.mxu0 0.0
    %1824 = vmatprep.subr.mxu0 0.0
    %1825 = vmatpush2.msra.mxu0 0.0
    %1826 = vmatprep.subr.mxu0 0.0
    %1827 = vmatpush2.msra.mxu0 0.0
    %1828 = vmatprep.subr.mxu0 0.0
    %1829 = vmatpush2.msra.mxu0 0.0
    %1830 = vmatprep.subr.mxu0 0.0
    %1831 = vmatpush2.msra.mxu0 0.0
    %1832 = vmatprep.subr.mxu0 0.0
    %1833 = vmatpush2.msra.mxu0 0.0
    %1834 = vmatprep.subr.mxu0 0.0
    %1835 = vmatpush2.msra.mxu0 0.0
    %1836 = vmatprep.subr.mxu0 0.0
    %1837 = vmatpush2.msra.mxu0 0.0
    %1838 = vmatprep.subr.mxu0 0.0
    %1839 = vmatpush2.msra.mxu0 0.0
    %1840 = vmatprep.subr.mxu0 0.0
    %1841 = vmatpush2.msra.mxu0 0.0
    %1842 = vmatprep.subr.mxu0 0.0
    %1843 = vmatpush2.msra.mxu0 0.0
    %1844 = vmatprep.subr.mxu0 0.0
    %1845 = vmatpush2.msra.mxu0 0.0
    %1846 = vmatprep.subr.mxu0 0.0
    %1847 = vmatpush2.msra.mxu0 0.0
    %1848 = vmatprep.mubr.f32.mxu0 0.0
    %1849 = vmatmul.mubr.f32.gmra.mxu0 %v1782
    %v1850 = vpop.f32.mrf.mxu0
    %v1851 = vadd.f32 0.0, %v1850
    %v1852 = vpop.f32.mrf.mxu0
    %1853 = vdwg.mxu0
    %v1854 = vadd.f32 %v1164, %v1851
    %v1855 = vxor.u32 %v1854, 2147483648
    %v1856 = vmul.f32 %v1855, 1.442695
    %v1857 = vpow.pop %v1856
    %v1858 = vadd.f32 %v1857, 1.0
    %v1859 = vrcp.pop %v1858
    %v1860 = vmul.f32 1.0, %v1859
    %v1861 = vtanh.pop %v1854
    %v1862 = vmul.f32 %v1860, %v1770
    %1864 = vrot.lane.b32.xlu0 %v1861, 64
    %v1865 = vpop.permute.xlu0 %1864
    %v1867 = vmul.f32 %v1860, %v1865
    %1869 = vrot.lane.b32.xlu0 %v1867, 32
    %v1870 = vpop.permute.xlu0 %1869
    %v1872 = vadd.f32 %v1862, %v1870
    %v1873 = vtanh.pop %v1872
    %1875 = vrot.lane.b32.xlu0 %v1873, 64
    %v1876 = vpop.permute.xlu0 %1875
    %v1878 = vmul.f32 %v1860, %v1876
    %1880 = vrot.lane.b32.xlu0 %v1878, 32
    %v1881 = vpop.permute.xlu0 %1880
    %1883 = vst.msk [vmem:[#allocation2 + $0x30] sm:$0xff] %vm202, %v1881
    %v1884 = vsel %vm202, %v1881, 0
    %1886 = vmatprep.subr.mxu0 0.0
    %1887 = vmatpush1.msra.mxu0 0.0
    %1888 = vmatprep.subr.mxu0 0.0
    %1889 = vmatpush1.msra.mxu0 0.0
    %1890 = vmatprep.subr.mxu0 0.0
    %1891 = vmatpush1.msra.mxu0 0.0
    %1892 = vmatprep.subr.mxu0 0.0
    %1893 = vmatpush1.msra.mxu0 0.0
    %1894 = vmatprep.subr.mxu0 0.0
    %1895 = vmatpush1.msra.mxu0 0.0
    %1896 = vmatprep.subr.mxu0 0.0
    %1897 = vmatpush1.msra.mxu0 0.0
    %1898 = vmatprep.subr.mxu0 0.0
    %1899 = vmatpush1.msra.mxu0 0.0
    %1900 = vmatprep.subr.mxu0 0.0
    %1901 = vmatpush1.msra.mxu0 0.0
    %1902 = vmatprep.subr.mxu0 0.0
    %1903 = vmatpush1.msra.mxu0 0.0
    %1904 = vmatprep.subr.mxu0 0.0
    %1905 = vmatpush1.msra.mxu0 0.0
    %1906 = vmatprep.subr.mxu0 0.0
    %1907 = vmatpush1.msra.mxu0 0.0
    %1908 = vmatprep.subr.mxu0 0.0
    %1909 = vmatpush1.msra.mxu0 0.0
    %1910 = vmatprep.subr.mxu0 0.0
    %1911 = vmatpush1.msra.mxu0 %v1035
    %1912 = vmatprep.subr.mxu0 0.0
    %1913 = vmatpush1.msra.mxu0 %v1034
    %1914 = vmatprep.subr.mxu0 0.0
    %1915 = vmatpush1.msra.mxu0 %v1033
    %1916 = vmatprep.subr.mxu0 0.0
    %1917 = vmatpush1.msra.mxu0 %v1032
    %1918 = vmatprep.subr.mxu0 0.0
    %1919 = vmatpush2.msra.mxu0 0.0
    %1920 = vmatprep.subr.mxu0 0.0
    %1921 = vmatpush2.msra.mxu0 0.0
    %1922 = vmatprep.subr.mxu0 0.0
    %1923 = vmatpush2.msra.mxu0 0.0
    %1924 = vmatprep.subr.mxu0 0.0
    %1925 = vmatpush2.msra.mxu0 0.0
    %1926 = vmatprep.subr.mxu0 0.0
    %1927 = vmatpush2.msra.mxu0 0.0
    %1928 = vmatprep.subr.mxu0 0.0
    %1929 = vmatpush2.msra.mxu0 0.0
    %1930 = vmatprep.subr.mxu0 0.0
    %1931 = vmatpush2.msra.mxu0 0.0
    %1932 = vmatprep.subr.mxu0 0.0
    %1933 = vmatpush2.msra.mxu0 0.0
    %1934 = vmatprep.subr.mxu0 0.0
    %1935 = vmatpush2.msra.mxu0 0.0
    %1936 = vmatprep.subr.mxu0 0.0
    %1937 = vmatpush2.msra.mxu0 0.0
    %1938 = vmatprep.subr.mxu0 0.0
    %1939 = vmatpush2.msra.mxu0 0.0
    %1940 = vmatprep.subr.mxu0 0.0
    %1941 = vmatpush2.msra.mxu0 0.0
    %1942 = vmatprep.subr.mxu0 0.0
    %1943 = vmatpush2.msra.mxu0 0.0
    %1944 = vmatprep.subr.mxu0 0.0
    %1945 = vmatpush2.msra.mxu0 0.0
    %1946 = vmatprep.subr.mxu0 0.0
    %1947 = vmatpush2.msra.mxu0 0.0
    %1948 = vmatprep.subr.mxu0 0.0
    %1949 = vmatpush2.msra.mxu0 0.0
    %1950 = vmatprep.mubr.f32.mxu0 0.0
    %1951 = vmatmul.mubr.f32.gmra.mxu0 %v1884
    %v1952 = vpop.f32.mrf.mxu0
    %v1953 = vadd.f32 0.0, %v1952
    %v1954 = vpop.f32.mrf.mxu0
    %1955 = vdwg.mxu0
    %v1956 = vadd.f32 %v1169, %v1953
    %v1957 = vxor.u32 %v1956, 2147483648
    %v1958 = vmul.f32 %v1957, 1.442695
    %v1959 = vpow.pop %v1958
    %v1960 = vadd.f32 %v1959, 1.0
    %v1961 = vrcp.pop %v1960
    %v1962 = vmul.f32 1.0, %v1961
    %v1963 = vtanh.pop %v1956
    %v1964 = vmul.f32 %v1962, %v1872
    %1966 = vrot.lane.b32.xlu0 %v1963, 64
    %v1967 = vpop.permute.xlu0 %1966
    %v1969 = vmul.f32 %v1962, %v1967
    %1971 = vrot.lane.b32.xlu0 %v1969, 32
    %v1972 = vpop.permute.xlu0 %1971
    %v1974 = vadd.f32 %v1964, %v1972
    %v1975 = vtanh.pop %v1974
    %1977 = vrot.lane.b32.xlu0 %v1975, 64
    %v1978 = vpop.permute.xlu0 %1977
    %v1980 = vmul.f32 %v1962, %v1978
    %1982 = vrot.lane.b32.xlu0 %v1980, 32
    %v1983 = vpop.permute.xlu0 %1982
    %1985 = vst.msk [vmem:[#allocation2 + $0x38] sm:$0xff] %vm202, %v1983
    %v1986 = vld [vmem:[#allocation2] sm:$0xff]
    %v1987 = vld [vmem:[#allocation2 + $0x8] sm:$0xff]
    %v1988 = vld [vmem:[#allocation2 + $0x10] sm:$0xff]
    %v1989 = vld [vmem:[#allocation2 + $0x18] sm:$0xff]
    %v1990 = vld [vmem:[#allocation2 + $0x20] sm:$0xff]
    %v1991 = vld [vmem:[#allocation2 + $0x28] sm:$0xff]
    %v1992 = vld [vmem:[#allocation2 + $0x30] sm:$0xff]
    %v1993 = vld [vmem:[#allocation2 + $0x38] sm:$0xff]
    %v1994 = vld [vmem:[#allocation3] sm:$0xff]
    %v1995 = vld [vmem:[#allocation3 + $0x8] sm:$0xff]
    %v1996 = vld [vmem:[#allocation3 + $0x10] sm:$0xff]
    %v1997 = vld [vmem:[#allocation3 + $0x18] sm:$0xff]
    %v1998 = vld [vmem:[%s8] sm:$0x1]
    %v2000 = vlaneseq
    %v2001 = vshrl.u32 %v2000, 7
    %v2002 = vsub.s32 0, %v2001
    %v2003 = vrot.slane %v1998, %v2002
    %v2006 = vsel %vm202, %v1986, 0
    %v2009 = vsel %vm202, %v1987, 0
    %v2012 = vsel %vm202, %v1988, 0
    %v2015 = vsel %vm202, %v1989, 0
    %v2018 = vsel %vm202, %v1990, 0
    %v2021 = vsel %vm202, %v1991, 0
    %v2024 = vsel %vm202, %v1992, 0
    %v2027 = vsel %vm202, %v1993, 0
    %2029 = vmatprep.subr.mxu0 0.0
    %2030 = vmatpush1.msra.mxu0 0.0
    %2031 = vmatprep.subr.mxu0 0.0
    %2032 = vmatpush1.msra.mxu0 0.0
    %2033 = vmatprep.subr.mxu0 0.0
    %2034 = vmatpush1.msra.mxu0 0.0
    %2035 = vmatprep.subr.mxu0 0.0
    %2036 = vmatpush1.msra.mxu0 0.0
    %2037 = vmatprep.subr.mxu0 0.0
    %2038 = vmatpush1.msra.mxu0 0.0
    %2039 = vmatprep.subr.mxu0 0.0
    %2040 = vmatpush1.msra.mxu0 0.0
    %2041 = vmatprep.subr.mxu0 0.0
    %2042 = vmatpush1.msra.mxu0 0.0
    %2043 = vmatprep.subr.mxu0 0.0
    %2044 = vmatpush1.msra.mxu0 0.0
    %2045 = vmatprep.subr.mxu0 0.0
    %2046 = vmatpush1.msra.mxu0 0.0
    %2047 = vmatprep.subr.mxu0 0.0
    %2048 = vmatpush1.msra.mxu0 0.0
    %2049 = vmatprep.subr.mxu0 0.0
    %2050 = vmatpush1.msra.mxu0 0.0
    %2051 = vmatprep.subr.mxu0 0.0
    %2052 = vmatpush1.msra.mxu0 0.0
    %2053 = vmatprep.subr.mxu0 0.0
    %2054 = vmatpush1.msra.mxu0 %v1997
    %2055 = vmatprep.subr.mxu0 0.0
    %2056 = vmatpush1.msra.mxu0 %v1996
    %2057 = vmatprep.subr.mxu0 0.0
    %2058 = vmatpush1.msra.mxu0 %v1995
    %2059 = vmatprep.subr.mxu0 0.0
    %2060 = vmatpush1.msra.mxu0 %v1994
    %2061 = vmatprep.subr.mxu0 0.0
    %2062 = vmatpush2.msra.mxu0 0.0
    %2063 = vmatprep.subr.mxu0 0.0
    %2064 = vmatpush2.msra.mxu0 0.0
    %2065 = vmatprep.subr.mxu0 0.0
    %2066 = vmatpush2.msra.mxu0 0.0
    %2067 = vmatprep.subr.mxu0 0.0
    %2068 = vmatpush2.msra.mxu0 0.0
    %2069 = vmatprep.subr.mxu0 0.0
    %2070 = vmatpush2.msra.mxu0 0.0
    %2071 = vmatprep.subr.mxu0 0.0
    %2072 = vmatpush2.msra.mxu0 0.0
    %2073 = vmatprep.subr.mxu0 0.0
    %2074 = vmatpush2.msra.mxu0 0.0
    %2075 = vmatprep.subr.mxu0 0.0
    %2076 = vmatpush2.msra.mxu0 0.0
    %2077 = vmatprep.subr.mxu0 0.0
    %2078 = vmatpush2.msra.mxu0 0.0
    %2079 = vmatprep.subr.mxu0 0.0
    %2080 = vmatpush2.msra.mxu0 0.0
    %2081 = vmatprep.subr.mxu0 0.0
    %2082 = vmatpush2.msra.mxu0 0.0
    %2083 = vmatprep.subr.mxu0 0.0
    %2084 = vmatpush2.msra.mxu0 0.0
    %2085 = vmatprep.subr.mxu0 0.0
    %2086 = vmatpush2.msra.mxu0 0.0
    %2087 = vmatprep.subr.mxu0 0.0
    %2088 = vmatpush2.msra.mxu0 0.0
    %2089 = vmatprep.subr.mxu0 0.0
    %2090 = vmatpush2.msra.mxu0 0.0
    %2091 = vmatprep.subr.mxu0 0.0
    %2092 = vmatpush2.msra.mxu0 0.0
    %2093 = vmatprep.mubr.f32.mxu0 0.0
    %2094 = vmatmul.mubr.f32.gmra.mxu0 %v2006
    %v2095 = vpop.f32.mrf.mxu0
    %v2096 = vadd.f32 %v2003, %v2095
    %v2097 = vpop.f32.mrf.mxu0
    %2098 = vmatprep.mubr.f32.mxu0 0.0
    %2099 = vmatmul.mubr.f32.gmra.mxu0 %v2009
    %v2100 = vpop.f32.mrf.mxu0
    %v2101 = vadd.f32 %v2003, %v2100
    %v2102 = vpop.f32.mrf.mxu0
    %2103 = vmatprep.mubr.f32.mxu0 0.0
    %2104 = vmatmul.mubr.f32.gmra.mxu0 %v2012
    %v2105 = vpop.f32.mrf.mxu0
    %v2106 = vadd.f32 %v2003, %v2105
    %v2107 = vpop.f32.mrf.mxu0
    %2108 = vmatprep.mubr.f32.mxu0 0.0
    %2109 = vmatmul.mubr.f32.gmra.mxu0 %v2015
    %v2110 = vpop.f32.mrf.mxu0
    %v2111 = vadd.f32 %v2003, %v2110
    %v2112 = vpop.f32.mrf.mxu0
    %2113 = vmatprep.mubr.f32.mxu0 0.0
    %2114 = vmatmul.mubr.f32.gmra.mxu0 %v2018
    %v2115 = vpop.f32.mrf.mxu0
    %v2116 = vadd.f32 %v2003, %v2115
    %v2117 = vpop.f32.mrf.mxu0
    %2118 = vmatprep.mubr.f32.mxu0 0.0
    %2119 = vmatmul.mubr.f32.gmra.mxu0 %v2021
    %v2120 = vpop.f32.mrf.mxu0
    %v2121 = vadd.f32 %v2003, %v2120
    %v2122 = vpop.f32.mrf.mxu0
    %2123 = vmatprep.mubr.f32.mxu0 0.0
    %2124 = vmatmul.mubr.f32.gmra.mxu0 %v2024
    %v2125 = vpop.f32.mrf.mxu0
    %v2126 = vadd.f32 %v2003, %v2125
    %v2127 = vpop.f32.mrf.mxu0
    %2128 = vmatprep.mubr.f32.mxu0 0.0
    %2129 = vmatmul.mubr.f32.gmra.mxu0 %v2027
    %v2130 = vpop.f32.mrf.mxu0
    %v2131 = vadd.f32 %v2003, %v2130
    %v2132 = vpop.f32.mrf.mxu0
    %2133 = vdwg.mxu0
    %v2134 = vtanh.pop %v2096
    %v2135 = vtanh.pop %v2101
    %v2136 = vtanh.pop %v2106
    %v2137 = vtanh.pop %v2111
    %v2138 = vtanh.pop %v2116
    %v2139 = vtanh.pop %v2121
    %v2140 = vtanh.pop %v2126
    %v2141 = vtanh.pop %v2131
    %v2142 = vld [vmem:[%s9] sm:$0xff]
    %v2143 = vld [vmem:[%s9 + $0x8] sm:$0xff]
    %v2144 = vld [vmem:[%s9 + $0x10] sm:$0xff]
    %v2145 = vld [vmem:[%s9 + $0x18] sm:$0xff]
    %v2146 = vld [vmem:[%s10] sm:$0x1]
    %v2148 = vlaneseq
    %v2149 = vshrl.u32 %v2148, 7
    %v2150 = vsub.s32 0, %v2149
    %v2151 = vrot.slane %v2146, %v2150
    %v2154 = vsel %vm202, %v2134, 0
    %v2157 = vsel %vm202, %v2135, 0
    %v2160 = vsel %vm202, %v2136, 0
    %v2163 = vsel %vm202, %v2137, 0
    %v2166 = vsel %vm202, %v2138, 0
    %v2169 = vsel %vm202, %v2139, 0
    %v2172 = vsel %vm202, %v2140, 0
    %v2175 = vsel %vm202, %v2141, 0
    %2177 = vmatprep.subr.mxu0 0.0
    %2178 = vmatpush1.msra.mxu0 0.0
    %2179 = vmatprep.subr.mxu0 0.0
    %2180 = vmatpush1.msra.mxu0 0.0
    %2181 = vmatprep.subr.mxu0 0.0
    %2182 = vmatpush1.msra.mxu0 0.0
    %2183 = vmatprep.subr.mxu0 0.0
    %2184 = vmatpush1.msra.mxu0 0.0
    %2185 = vmatprep.subr.mxu0 0.0
    %2186 = vmatpush1.msra.mxu0 0.0
    %2187 = vmatprep.subr.mxu0 0.0
    %2188 = vmatpush1.msra.mxu0 0.0
    %2189 = vmatprep.subr.mxu0 0.0
    %2190 = vmatpush1.msra.mxu0 0.0
    %2191 = vmatprep.subr.mxu0 0.0
    %2192 = vmatpush1.msra.mxu0 0.0
    %2193 = vmatprep.subr.mxu0 0.0
    %2194 = vmatpush1.msra.mxu0 0.0
    %2195 = vmatprep.subr.mxu0 0.0
    %2196 = vmatpush1.msra.mxu0 0.0
    %2197 = vmatprep.subr.mxu0 0.0
    %2198 = vmatpush1.msra.mxu0 0.0
    %2199 = vmatprep.subr.mxu0 0.0
    %2200 = vmatpush1.msra.mxu0 0.0
    %2201 = vmatprep.subr.mxu0 0.0
    %2202 = vmatpush1.msra.mxu0 %v2145
    %2203 = vmatprep.subr.mxu0 0.0
    %2204 = vmatpush1.msra.mxu0 %v2144
    %2205 = vmatprep.subr.mxu0 0.0
    %2206 = vmatpush1.msra.mxu0 %v2143
    %2207 = vmatprep.subr.mxu0 0.0
    %2208 = vmatpush1.msra.mxu0 %v2142
    %2209 = vmatprep.subr.mxu0 0.0
    %2210 = vmatpush2.msra.mxu0 0.0
    %2211 = vmatprep.subr.mxu0 0.0
    %2212 = vmatpush2.msra.mxu0 0.0
    %2213 = vmatprep.subr.mxu0 0.0
    %2214 = vmatpush2.msra.mxu0 0.0
    %2215 = vmatprep.subr.mxu0 0.0
    %2216 = vmatpush2.msra.mxu0 0.0
    %2217 = vmatprep.subr.mxu0 0.0
    %2218 = vmatpush2.msra.mxu0 0.0
    %2219 = vmatprep.subr.mxu0 0.0
    %2220 = vmatpush2.msra.mxu0 0.0
    %2221 = vmatprep.subr.mxu0 0.0
    %2222 = vmatpush2.msra.mxu0 0.0
    %2223 = vmatprep.subr.mxu0 0.0
    %2224 = vmatpush2.msra.mxu0 0.0
    %2225 = vmatprep.subr.mxu0 0.0
    %2226 = vmatpush2.msra.mxu0 0.0
    %2227 = vmatprep.subr.mxu0 0.0
    %2228 = vmatpush2.msra.mxu0 0.0
    %2229 = vmatprep.subr.mxu0 0.0
    %2230 = vmatpush2.msra.mxu0 0.0
    %2231 = vmatprep.subr.mxu0 0.0
    %2232 = vmatpush2.msra.mxu0 0.0
    %2233 = vmatprep.subr.mxu0 0.0
    %2234 = vmatpush2.msra.mxu0 0.0
    %2235 = vmatprep.subr.mxu0 0.0
    %2236 = vmatpush2.msra.mxu0 0.0
    %2237 = vmatprep.subr.mxu0 0.0
    %2238 = vmatpush2.msra.mxu0 0.0
    %2239 = vmatprep.subr.mxu0 0.0
    %2240 = vmatpush2.msra.mxu0 0.0
    %2241 = vmatprep.mubr.f32.mxu0 0.0
    %2242 = vmatmul.mubr.f32.gmra.mxu0 %v2154
    %v2243 = vpop.f32.mrf.mxu0
    %v2244 = vadd.f32 %v2151, %v2243
    %v2245 = vpop.f32.mrf.mxu0
    %2246 = vmatprep.mubr.f32.mxu0 0.0
    %2247 = vmatmul.mubr.f32.gmra.mxu0 %v2157
    %v2248 = vpop.f32.mrf.mxu0
    %v2249 = vadd.f32 %v2151, %v2248
    %v2250 = vpop.f32.mrf.mxu0
    %2251 = vmatprep.mubr.f32.mxu0 0.0
    %2252 = vmatmul.mubr.f32.gmra.mxu0 %v2160
    %v2253 = vpop.f32.mrf.mxu0
    %v2254 = vadd.f32 %v2151, %v2253
    %v2255 = vpop.f32.mrf.mxu0
    %2256 = vmatprep.mubr.f32.mxu0 0.0
    %2257 = vmatmul.mubr.f32.gmra.mxu0 %v2163
    %v2258 = vpop.f32.mrf.mxu0
    %v2259 = vadd.f32 %v2151, %v2258
    %v2260 = vpop.f32.mrf.mxu0
    %2261 = vmatprep.mubr.f32.mxu0 0.0
    %2262 = vmatmul.mubr.f32.gmra.mxu0 %v2166
    %v2263 = vpop.f32.mrf.mxu0
    %v2264 = vadd.f32 %v2151, %v2263
    %v2265 = vpop.f32.mrf.mxu0
    %2266 = vmatprep.mubr.f32.mxu0 0.0
    %2267 = vmatmul.mubr.f32.gmra.mxu0 %v2169
    %v2268 = vpop.f32.mrf.mxu0
    %v2269 = vadd.f32 %v2151, %v2268
    %v2270 = vpop.f32.mrf.mxu0
    %2271 = vmatprep.mubr.f32.mxu0 0.0
    %2272 = vmatmul.mubr.f32.gmra.mxu0 %v2172
    %v2273 = vpop.f32.mrf.mxu0
    %v2274 = vadd.f32 %v2151, %v2273
    %v2275 = vpop.f32.mrf.mxu0
    %2276 = vmatprep.mubr.f32.mxu0 0.0
    %2277 = vmatmul.mubr.f32.gmra.mxu0 %v2175
    %v2278 = vpop.f32.mrf.mxu0
    %v2279 = vadd.f32 %v2151, %v2278
    %v2280 = vpop.f32.mrf.mxu0
    %2281 = vdwg.mxu0
    %vm2282 = vcmask 31744
    %2283 = vst.msk [vmem:[%s11] sm:$0xff] %vm2282, %v2244
    %2284 = vst.msk [vmem:[%s11 + $0x8] sm:$0xff] %vm2282, %v2249
    %2285 = vst.msk [vmem:[%s11 + $0x10] sm:$0xff] %vm2282, %v2254
    %2286 = vst.msk [vmem:[%s11 + $0x18] sm:$0xff] %vm2282, %v2259
    %2287 = vst.msk [vmem:[%s11 + $0x20] sm:$0xff] %vm2282, %v2264
    %2288 = vst.msk [vmem:[%s11 + $0x28] sm:$0xff] %vm2282, %v2269
    %2289 = vst.msk [vmem:[%s11 + $0x30] sm:$0xff] %vm2282, %v2274
    %2290 = vst.msk [vmem:[%s11 + $0x38] sm:$0xff] %vm2282, %v2279
    // Predicated region
    $region50: #{tpu_custom_call.1} parent=1 // pred_check
      _
    $region51: #{tpu_custom_call.1} parent=1 // pred_check_branch
      %2292 = sbr.rel (0) target = $region53
    $region52: #{tpu_custom_call.1} parent=1 // pred_region
      _
    $region53: #{tpu_custom_call.1} parent=1 // pred_fallthru
      _
    // Predicated region
    $region54: #{tpu_custom_call.1} parent=1 // pred_check
      _
    $region55: #{tpu_custom_call.1} parent=1 // pred_check_branch
      %2294 = sbr.rel (0) target = $region57
    $region56: #{tpu_custom_call.1} parent=1 // pred_region
      _
    $region57: #{tpu_custom_call.1} parent=1 // pred_fallthru
      _
    %2295 = vsyncpa [#allocation4], 1

</llo_original>
